<compile_context>
chip_gen: v6e
topology: v6e:2x2x1
jax: 0.10.0
libtpu: 0.0.40
codegen_flags: <defaults>
</compile_context>

<pallas_src>
import jax
import jax.numpy as jnp
from jax.experimental import pallas as pl
from jax.experimental.pallas import tpu as pltpu


def _round_up(v, m):
    return ((v + m - 1) // m) * m


def _conv1x1_kernel(x_ref, w_ref, o_ref):
    # x_ref: (Cin, TP) f32   w_ref: (Cout, Cin) f32   o_ref: (Cout, TP) f32
    # In-kernel bf16 cast (essentially free on the VPU) -> MXU matmul with
    # f32 accumulation.
    x = x_ref[...].astype(jnp.bfloat16)
    w = w_ref[...].astype(jnp.bfloat16)
    o_ref[...] = jnp.dot(w, x, preferred_element_type=jnp.float32).astype(o_ref.dtype)


def _is_dual_tensorcore_chip():
    # v7x packs 2 TensorCores per chip; give it one lane tile per core.
    try:
        kind = jax.devices()[0].device_kind.lower()
    except Exception:
        return False
    return "v7" in kind


def conv2d_1x1(x_nchw, weight):
    """1x1 conv, stride 1, no bias.

    x_nchw: [N, Cin, H, W] f32; weight: [Cout, Cin, 1, 1] f32.
    Returns [N, Cout, H, W] f32 (bf16 MXU inputs, f32 accumulation).
    """
    n, cin, h, w = x_nchw.shape
    cout = weight.shape[0]
    p = h * w

    # Free views (no transpose, no pad, no dtype-convert pass).
    x3 = x_nchw.reshape(n, cin, p)
    w_mat = weight.reshape(cout, cin)

    # Lane tiling:
    #  * single-TC chips (v5e/v6e): one full-P tile per batch element.
    #  * v7x (2 TCs): two 128-aligned lane tiles so the "parallel" lane-tile
    #    axis is megacore-sharded; the edge block is masked on writeback so no
    #    padding is needed (and the OOB input lanes never affect valid output
    #    lanes since the contraction is over the fully in-bounds Cin axis).
    if _is_dual_tensorcore_chip() and p > 128:
        blk = max(128, _round_up(pl.cdiv(p, 2), 128))
    else:
        blk = p
    num_p_tiles = pl.cdiv(p, blk)

    flops = 2 * n * cout * cin * p
    bytes_accessed = x3.size * 4 + w_mat.size * 4 + n * cout * p * 4

    out = pl.pallas_call(
        _conv1x1_kernel,
        out_shape=jax.ShapeDtypeStruct((n, cout, p), jnp.float32),
        grid=(n, num_p_tiles),
        in_specs=[
            # X tile: one batch element, all input channels, one lane block.
            pl.BlockSpec((pl.Squeezed(), cin, blk), lambda b, j: (b, 0, j)),
            # Weight: constant index_map -> DMA'd once, stays resident in VMEM.
            pl.BlockSpec((cout, cin), lambda b, j: (0, 0)),
        ],
        out_specs=pl.BlockSpec((pl.Squeezed(), cout, blk), lambda b, j: (b, 0, j)),
        compiler_params=pltpu.CompilerParams(
            dimension_semantics=("parallel", "parallel"),
        ),
        cost_estimate=pl.CostEstimate(
            flops=flops, transcendentals=0, bytes_accessed=bytes_accessed
        ),
    )(x3, w_mat)

    # Contiguous reshape back to NCHW is free.
    return out.reshape(n, cout, h, w)


if __name__ == "__main__":
    key = jax.random.PRNGKey(0)
    kx, kw = jax.random.split(key)

    # Shapes from the module: Conv2d(480 -> 80, 1x1, no bias), input [1, 480, 28, 28].
    N, CIN, H, W = 1, 480, 28, 28
    COUT = 80

    x = jax.random.normal(kx, (N, CIN, H, W), dtype=jnp.float32)
    weight = jax.random.normal(kw, (COUT, CIN, 1, 1), dtype=jnp.float32) * (1.0 / (CIN ** 0.5))

    out = jax.block_until_ready(conv2d_1x1(x, weight))
    assert out.shape == (N, COUT, H, W)
    assert out.dtype == jnp.float32

    # Like-for-like reference: bf16-rounded inputs, f32 accumulation.
    ref_bf16 = jnp.einsum(
        "oc,nchw->nohw",
        weight.reshape(COUT, CIN).astype(jnp.bfloat16).astype(jnp.float32),
        x.astype(jnp.bfloat16).astype(jnp.float32),
    )
    assert jnp.allclose(out, ref_bf16, atol=1e-2, rtol=1e-2)

    # Loose check against the pure-f32 conv (bf16 input rounding error only).
    ref_f32 = jnp.einsum("oc,nchw->nohw", weight.reshape(COUT, CIN), x)
    assert jnp.allclose(out, ref_f32, atol=5e-2, rtol=5e-2)

    print("KERNEL_OK")
</pallas_src>

<mosaic_0001>
module attributes {stable_mosaic.version = 11 : i64} {
  func.func @_conv1x1_kernel(%arg0: i32, %arg1: i32, %arg2: memref<1x480x784xf32, #tpu.memory_space<vmem>>, %arg3: memref<80x480xf32, #tpu.memory_space<vmem>>, %arg4: memref<1x80x784xf32, #tpu.memory_space<vmem>>) attributes {dimension_semantics = [#tpu.dimension_semantics<parallel>, #tpu.dimension_semantics<parallel>], iteration_bounds = array<i64: 1, 1>, scalar_prefetch = 0 : i64, scratch_operands = 0 : i64, tpu.core_type = #tpu.core_type<tc>, window_params = [{transform_indices = @transform_0, window_bounds = array<i64: 1, 480, 784>}, {pipeline_mode = #tpu.pipeline_mode<synchronous>, transform_indices = @transform_1, window_bounds = array<i64: 80, 480>}, {transform_indices = @transform_2, window_bounds = array<i64: 1, 80, 784>}]} {
    %c0 = arith.constant 0 : index
    %c0_0 = arith.constant 0 : index
    %c0_1 = arith.constant 0 : index
    %0 = vector.load %arg2[%c0, %c0_0, %c0_1] : memref<1x480x784xf32, #tpu.memory_space<vmem>>, vector<1x480x784xf32>
    %1 = vector.shape_cast %0 : vector<1x480x784xf32> to vector<480x784xf32>
    %2 = arith.truncf %1 : vector<480x784xf32> to vector<480x784xbf16>
    %c0_2 = arith.constant 0 : index
    %c0_3 = arith.constant 0 : index
    %3 = vector.load %arg3[%c0_2, %c0_3] : memref<80x480xf32, #tpu.memory_space<vmem>>, vector<80x480xf32>
    %4 = arith.truncf %3 : vector<80x480xf32> to vector<80x480xbf16>
    %cst = arith.constant dense<0.000000e+00> : vector<80x784xf32>
    %5 = tpu.matmul %4, %2, %cst {dimension_numbers = #tpu.dot_dimension_numbers<[1], [0], [0], [1], [0, 0, 1, 1], [], []>} : vector<80x480xbf16>, vector<480x784xbf16>, vector<80x784xf32> -> vector<80x784xf32>
    %c0_4 = arith.constant 0 : index
    %c0_5 = arith.constant 0 : index
    %c0_6 = arith.constant 0 : index
    %6 = vector.load %arg4[%c0_4, %c0_5, %c0_6] : memref<1x80x784xf32, #tpu.memory_space<vmem>>, vector<1x80x784xf32>
    %7 = vector.shape_cast %6 : vector<1x80x784xf32> to vector<80x784xf32>
    %8 = vector.shape_cast %5 : vector<80x784xf32> to vector<1x80x784xf32>
    tpu.vector_store %arg4[%c0_4, %c0_5, %c0_6], %8 {strides = array<i32>} : memref<1x80x784xf32, #tpu.memory_space<vmem>>, vector<1x80x784xf32>,
    return
  }
  func.func @transform_0(%arg0: i32, %arg1: i32) -> (i32, i32, i32) {
    %c0_i32 = arith.constant 0 : i32
    %c0_i32_0 = arith.constant 0 : i32
    return %arg0, %c0_i32, %arg1 : i32, i32, i32
  }
  func.func @transform_1(%arg0: i32, %arg1: i32) -> (i32, i32) {
    %c0_i32 = arith.constant 0 : i32
    %c0_i32_0 = arith.constant 0 : i32
    %c0_i32_1 = arith.constant 0 : i32
    return %c0_i32, %c0_i32_0 : i32, i32
  }
  func.func @transform_2(%arg0: i32, %arg1: i32) -> (i32, i32, i32) {
    %c0_i32 = arith.constant 0 : i32
    %c0_i32_0 = arith.constant 0 : i32
    return %arg0, %c0_i32, %arg1 : i32, i32, i32
  }
}

</mosaic_0001>

<llo_original>
// kernel: tpu_custom_call.1
$region0: #{tpu_custom_call.1}
  #allocation0 [shape = 'u32[]', space=smem, size = 0x4, offset = 0x4, fixed_abs, tag = 'smem constant byte address 0x4 - core index']
  #allocation1 [shape = 'u32[144,128]{1,0:T(1,128)}', space=vmem, size = 0x12000, scoped, tag = 'internal scratch']
  %s0 = inlined_call_operand.vmem [shape: f32[1,480,784], index: 0, kind: input, shape index: {}]
  %s1 = inlined_call_operand.vmem [shape: f32[80,480], index: 1, kind: input, shape index: {}]
  %s2 = inlined_call_operand.hbm [shape: f32[1,80,784], index: 2, kind: output, shape index: {}]
  %s3 = sld [smem:[#allocation0]]
  $region18: #{tpu_custom_call.1} parent=0
    _
  %s5 = ssub.s32 1, %s3
  %s6 = scalar_select 0, %s5, %s3
  $region1: #{tpu_custom_call.1} parent=0
    #allocation2 [shape = 'u8[286720]{0}', space=vmem, size = 0x46000, scoped, tag = 'output window, operand 0, single buffered']
    #allocation3 [shape = 's32[1]{0}', space=sflag, size = 0x4, scoped, tag = 'scoped memory for tpu_custom_call.1']
    %7 = vsyncpa [#allocation3], 0
    // Predicated region
    $region2: #{tpu_custom_call.1} parent=1 // pred_check
      _
    $region3: #{tpu_custom_call.1} parent=1 // pred_check_branch
      %9 = sbr.rel (0) target = $region5
    $region4: #{tpu_custom_call.1} parent=1 // pred_region
      _
    $region5: #{tpu_custom_call.1} parent=1 // pred_fallthru
      _
    // Predicated region
    $region6: #{tpu_custom_call.1} parent=1 // pred_check
      _
    $region7: #{tpu_custom_call.1} parent=1 // pred_check_branch
      %11 = sbr.rel (0) target = $region9
    $region8: #{tpu_custom_call.1} parent=1 // pred_region
      _
    $region9: #{tpu_custom_call.1} parent=1 // pred_fallthru
      _
    %v13 = vld [vmem:[%s0] sm:$0xff]
    %v14 = vld [vmem:[%s0 + $0x8] sm:$0xff]
    %v15 = vld [vmem:[%s0 + $0x10] sm:$0xff]
    %v16 = vld [vmem:[%s0 + $0x18] sm:$0xff]
    %v17 = vld [vmem:[%s0 + $0x20] sm:$0xff]
    %v18 = vld [vmem:[%s0 + $0x28] sm:$0xff]
    %v19 = vld [vmem:[%s0 + $0x30] sm:$0xff]
    %v20 = vld [vmem:[%s0 + $0x38] sm:$0xff]
    %v21 = vld [vmem:[%s0 + $0x40] sm:$0xff]
    %v22 = vld [vmem:[%s0 + $0x48] sm:$0xff]
    %v23 = vld [vmem:[%s0 + $0x50] sm:$0xff]
    %v24 = vld [vmem:[%s0 + $0x58] sm:$0xff]
    %v25 = vld [vmem:[%s0 + $0x60] sm:$0xff]
    %v26 = vld [vmem:[%s0 + $0x68] sm:$0xff]
    %v27 = vld [vmem:[%s0 + $0x70] sm:$0xff]
    %v28 = vld [vmem:[%s0 + $0x78] sm:$0xff]
    %v29 = vld [vmem:[%s0 + $0x80] sm:$0xff]
    %v30 = vld [vmem:[%s0 + $0x88] sm:$0xff]
    %v31 = vld [vmem:[%s0 + $0x90] sm:$0xff]
    %v32 = vld [vmem:[%s0 + $0x98] sm:$0xff]
    %v33 = vld [vmem:[%s0 + $0xa0] sm:$0xff]
    %v34 = vld [vmem:[%s0 + $0xa8] sm:$0xff]
    %v35 = vld [vmem:[%s0 + $0xb0] sm:$0xff]
    %v36 = vld [vmem:[%s0 + $0xb8] sm:$0xff]
    %v37 = vld [vmem:[%s0 + $0xc0] sm:$0xff]
    %v38 = vld [vmem:[%s0 + $0xc8] sm:$0xff]
    %v39 = vld [vmem:[%s0 + $0xd0] sm:$0xff]
    %v40 = vld [vmem:[%s0 + $0xd8] sm:$0xff]
    %v41 = vld [vmem:[%s0 + $0xe0] sm:$0xff]
    %v42 = vld [vmem:[%s0 + $0xe8] sm:$0xff]
    %v43 = vld [vmem:[%s0 + $0xf0] sm:$0xff]
    %v44 = vld [vmem:[%s0 + $0xf8] sm:$0xff]
    %v45 = vld [vmem:[%s0 + $0x100] sm:$0xff]
    %v46 = vld [vmem:[%s0 + $0x108] sm:$0xff]
    %v47 = vld [vmem:[%s0 + $0x110] sm:$0xff]
    %v48 = vld [vmem:[%s0 + $0x118] sm:$0xff]
    %v49 = vld [vmem:[%s0 + $0x120] sm:$0xff]
    %v50 = vld [vmem:[%s0 + $0x128] sm:$0xff]
    %v51 = vld [vmem:[%s0 + $0x130] sm:$0xff]
    %v52 = vld [vmem:[%s0 + $0x138] sm:$0xff]
    %v53 = vld [vmem:[%s0 + $0x140] sm:$0xff]
    %v54 = vld [vmem:[%s0 + $0x148] sm:$0xff]
    %v55 = vld [vmem:[%s0 + $0x150] sm:$0xff]
    %v56 = vld [vmem:[%s0 + $0x158] sm:$0xff]
    %v57 = vld [vmem:[%s0 + $0x160] sm:$0xff]
    %v58 = vld [vmem:[%s0 + $0x168] sm:$0xff]
    %v59 = vld [vmem:[%s0 + $0x170] sm:$0xff]
    %v60 = vld [vmem:[%s0 + $0x178] sm:$0xff]
    %v61 = vld [vmem:[%s0 + $0x180] sm:$0xff]
    %v62 = vld [vmem:[%s0 + $0x188] sm:$0xff]
    %v63 = vld [vmem:[%s0 + $0x190] sm:$0xff]
    %v64 = vld [vmem:[%s0 + $0x198] sm:$0xff]
    %v65 = vld [vmem:[%s0 + $0x1a0] sm:$0xff]
    %v66 = vld [vmem:[%s0 + $0x1a8] sm:$0xff]
    %v67 = vld [vmem:[%s0 + $0x1b0] sm:$0xff]
    %v68 = vld [vmem:[%s0 + $0x1b8] sm:$0xff]
    %v69 = vld [vmem:[%s0 + $0x1c0] sm:$0xff]
    %v70 = vld [vmem:[%s0 + $0x1c8] sm:$0xff]
    %v71 = vld [vmem:[%s0 + $0x1d0] sm:$0xff]
    %v72 = vld [vmem:[%s0 + $0x1d8] sm:$0xff]
    %v73 = vld [vmem:[%s0 + $0x1e0] sm:$0xff]
    %v74 = vld [vmem:[%s0 + $0x1e8] sm:$0xff]
    %v75 = vld [vmem:[%s0 + $0x1f0] sm:$0xff]
    %v76 = vld [vmem:[%s0 + $0x1f8] sm:$0xff]
    %v77 = vld [vmem:[%s0 + $0x200] sm:$0xff]
    %v78 = vld [vmem:[%s0 + $0x208] sm:$0xff]
    %v79 = vld [vmem:[%s0 + $0x210] sm:$0xff]
    %v80 = vld [vmem:[%s0 + $0x218] sm:$0xff]
    %v81 = vld [vmem:[%s0 + $0x220] sm:$0xff]
    %v82 = vld [vmem:[%s0 + $0x228] sm:$0xff]
    %v83 = vld [vmem:[%s0 + $0x230] sm:$0xff]
    %v84 = vld [vmem:[%s0 + $0x238] sm:$0xff]
    %v85 = vld [vmem:[%s0 + $0x240] sm:$0xff]
    %v86 = vld [vmem:[%s0 + $0x248] sm:$0xff]
    %v87 = vld [vmem:[%s0 + $0x250] sm:$0xff]
    %v88 = vld [vmem:[%s0 + $0x258] sm:$0xff]
    %v89 = vld [vmem:[%s0 + $0x260] sm:$0xff]
    %v90 = vld [vmem:[%s0 + $0x268] sm:$0xff]
    %v91 = vld [vmem:[%s0 + $0x270] sm:$0xff]
    %v92 = vld [vmem:[%s0 + $0x278] sm:$0xff]
    %v93 = vld [vmem:[%s0 + $0x280] sm:$0xff]
    %v94 = vld [vmem:[%s0 + $0x288] sm:$0xff]
    %v95 = vld [vmem:[%s0 + $0x290] sm:$0xff]
    %v96 = vld [vmem:[%s0 + $0x298] sm:$0xff]
    %v97 = vld [vmem:[%s0 + $0x2a0] sm:$0xff]
    %v98 = vld [vmem:[%s0 + $0x2a8] sm:$0xff]
    %v99 = vld [vmem:[%s0 + $0x2b0] sm:$0xff]
    %v100 = vld [vmem:[%s0 + $0x2b8] sm:$0xff]
    %v101 = vld [vmem:[%s0 + $0x2c0] sm:$0xff]
    %v102 = vld [vmem:[%s0 + $0x2c8] sm:$0xff]
    %v103 = vld [vmem:[%s0 + $0x2d0] sm:$0xff]
    %v104 = vld [vmem:[%s0 + $0x2d8] sm:$0xff]
    %v105 = vld [vmem:[%s0 + $0x2e0] sm:$0xff]
    %v106 = vld [vmem:[%s0 + $0x2e8] sm:$0xff]
    %v107 = vld [vmem:[%s0 + $0x2f0] sm:$0xff]
    %v108 = vld [vmem:[%s0 + $0x2f8] sm:$0xff]
    %v109 = vld [vmem:[%s0 + $0x300] sm:$0xff]
    %v110 = vld [vmem:[%s0 + $0x308] sm:$0xff]
    %v111 = vld [vmem:[%s0 + $0x310] sm:$0xff]
    %v112 = vld [vmem:[%s0 + $0x318] sm:$0xff]
    %v113 = vld [vmem:[%s0 + $0x320] sm:$0xff]
    %v114 = vld [vmem:[%s0 + $0x328] sm:$0xff]
    %v115 = vld [vmem:[%s0 + $0x330] sm:$0xff]
    %v116 = vld [vmem:[%s0 + $0x338] sm:$0xff]
    %v117 = vld [vmem:[%s0 + $0x340] sm:$0xff]
    %v118 = vld [vmem:[%s0 + $0x348] sm:$0xff]
    %v119 = vld [vmem:[%s0 + $0x350] sm:$0xff]
    %v120 = vld [vmem:[%s0 + $0x358] sm:$0xff]
    %v121 = vld [vmem:[%s0 + $0x360] sm:$0xff]
    %v122 = vld [vmem:[%s0 + $0x368] sm:$0xff]
    %v123 = vld [vmem:[%s0 + $0x370] sm:$0xff]
    %v124 = vld [vmem:[%s0 + $0x378] sm:$0xff]
    %v125 = vld [vmem:[%s0 + $0x380] sm:$0xff]
    %v126 = vld [vmem:[%s0 + $0x388] sm:$0xff]
    %v127 = vld [vmem:[%s0 + $0x390] sm:$0xff]
    %v128 = vld [vmem:[%s0 + $0x398] sm:$0xff]
    %v129 = vld [vmem:[%s0 + $0x3a0] sm:$0xff]
    %v130 = vld [vmem:[%s0 + $0x3a8] sm:$0xff]
    %v131 = vld [vmem:[%s0 + $0x3b0] sm:$0xff]
    %v132 = vld [vmem:[%s0 + $0x3b8] sm:$0xff]
    %v133 = vld [vmem:[%s0 + $0x3c0] sm:$0xff]
    %v134 = vld [vmem:[%s0 + $0x3c8] sm:$0xff]
    %v135 = vld [vmem:[%s0 + $0x3d0] sm:$0xff]
    %v136 = vld [vmem:[%s0 + $0x3d8] sm:$0xff]
    %v137 = vld [vmem:[%s0 + $0x3e0] sm:$0xff]
    %v138 = vld [vmem:[%s0 + $0x3e8] sm:$0xff]
    %v139 = vld [vmem:[%s0 + $0x3f0] sm:$0xff]
    %v140 = vld [vmem:[%s0 + $0x3f8] sm:$0xff]
    %v141 = vld [vmem:[%s0 + $0x400] sm:$0xff]
    %v142 = vld [vmem:[%s0 + $0x408] sm:$0xff]
    %v143 = vld [vmem:[%s0 + $0x410] sm:$0xff]
    %v144 = vld [vmem:[%s0 + $0x418] sm:$0xff]
    %v145 = vld [vmem:[%s0 + $0x420] sm:$0xff]
    %v146 = vld [vmem:[%s0 + $0x428] sm:$0xff]
    %v147 = vld [vmem:[%s0 + $0x430] sm:$0xff]
    %v148 = vld [vmem:[%s0 + $0x438] sm:$0xff]
    %v149 = vld [vmem:[%s0 + $0x440] sm:$0xff]
    %v150 = vld [vmem:[%s0 + $0x448] sm:$0xff]
    %v151 = vld [vmem:[%s0 + $0x450] sm:$0xff]
    %v152 = vld [vmem:[%s0 + $0x458] sm:$0xff]
    %v153 = vld [vmem:[%s0 + $0x460] sm:$0xff]
    %v154 = vld [vmem:[%s0 + $0x468] sm:$0xff]
    %v155 = vld [vmem:[%s0 + $0x470] sm:$0xff]
    %v156 = vld [vmem:[%s0 + $0x478] sm:$0xff]
    %v157 = vld [vmem:[%s0 + $0x480] sm:$0xff]
    %v158 = vld [vmem:[%s0 + $0x488] sm:$0xff]
    %v159 = vld [vmem:[%s0 + $0x490] sm:$0xff]
    %v160 = vld [vmem:[%s0 + $0x498] sm:$0xff]
    %v161 = vld [vmem:[%s0 + $0x4a0] sm:$0xff]
    %v162 = vld [vmem:[%s0 + $0x4a8] sm:$0xff]
    %v163 = vld [vmem:[%s0 + $0x4b0] sm:$0xff]
    %v164 = vld [vmem:[%s0 + $0x4b8] sm:$0xff]
    %v165 = vld [vmem:[%s0 + $0x4c0] sm:$0xff]
    %v166 = vld [vmem:[%s0 + $0x4c8] sm:$0xff]
    %v167 = vld [vmem:[%s0 + $0x4d0] sm:$0xff]
    %v168 = vld [vmem:[%s0 + $0x4d8] sm:$0xff]
    %v169 = vld [vmem:[%s0 + $0x4e0] sm:$0xff]
    %v170 = vld [vmem:[%s0 + $0x4e8] sm:$0xff]
    %v171 = vld [vmem:[%s0 + $0x4f0] sm:$0xff]
    %v172 = vld [vmem:[%s0 + $0x4f8] sm:$0xff]
    %v173 = vld [vmem:[%s0 + $0x500] sm:$0xff]
    %v174 = vld [vmem:[%s0 + $0x508] sm:$0xff]
    %v175 = vld [vmem:[%s0 + $0x510] sm:$0xff]
    %v176 = vld [vmem:[%s0 + $0x518] sm:$0xff]
    %v177 = vld [vmem:[%s0 + $0x520] sm:$0xff]
    %v178 = vld [vmem:[%s0 + $0x528] sm:$0xff]
    %v179 = vld [vmem:[%s0 + $0x530] sm:$0xff]
    %v180 = vld [vmem:[%s0 + $0x538] sm:$0xff]
    %v181 = vld [vmem:[%s0 + $0x540] sm:$0xff]
    %v182 = vld [vmem:[%s0 + $0x548] sm:$0xff]
    %v183 = vld [vmem:[%s0 + $0x550] sm:$0xff]
    %v184 = vld [vmem:[%s0 + $0x558] sm:$0xff]
    %v185 = vld [vmem:[%s0 + $0x560] sm:$0xff]
    %v186 = vld [vmem:[%s0 + $0x568] sm:$0xff]
    %v187 = vld [vmem:[%s0 + $0x570] sm:$0xff]
    %v188 = vld [vmem:[%s0 + $0x578] sm:$0xff]
    %v189 = vld [vmem:[%s0 + $0x580] sm:$0xff]
    %v190 = vld [vmem:[%s0 + $0x588] sm:$0xff]
    %v191 = vld [vmem:[%s0 + $0x590] sm:$0xff]
    %v192 = vld [vmem:[%s0 + $0x598] sm:$0xff]
    %v193 = vld [vmem:[%s0 + $0x5a0] sm:$0xff]
    %v194 = vld [vmem:[%s0 + $0x5a8] sm:$0xff]
    %v195 = vld [vmem:[%s0 + $0x5b0] sm:$0xff]
    %v196 = vld [vmem:[%s0 + $0x5b8] sm:$0xff]
    %v197 = vld [vmem:[%s0 + $0x5c0] sm:$0xff]
    %v198 = vld [vmem:[%s0 + $0x5c8] sm:$0xff]
    %v199 = vld [vmem:[%s0 + $0x5d0] sm:$0xff]
    %v200 = vld [vmem:[%s0 + $0x5d8] sm:$0xff]
    %v201 = vld [vmem:[%s0 + $0x5e0] sm:$0xff]
    %v202 = vld [vmem:[%s0 + $0x5e8] sm:$0xff]
    %v203 = vld [vmem:[%s0 + $0x5f0] sm:$0xff]
    %v204 = vld [vmem:[%s0 + $0x5f8] sm:$0xff]
    %v205 = vld [vmem:[%s0 + $0x600] sm:$0xff]
    %v206 = vld [vmem:[%s0 + $0x608] sm:$0xff]
    %v207 = vld [vmem:[%s0 + $0x610] sm:$0xff]
    %v208 = vld [vmem:[%s0 + $0x618] sm:$0xff]
    %v209 = vld [vmem:[%s0 + $0x620] sm:$0xff]
    %v210 = vld [vmem:[%s0 + $0x628] sm:$0xff]
    %v211 = vld [vmem:[%s0 + $0x630] sm:$0xff]
    %v212 = vld [vmem:[%s0 + $0x638] sm:$0xff]
    %v213 = vld [vmem:[%s0 + $0x640] sm:$0xff]
    %v214 = vld [vmem:[%s0 + $0x648] sm:$0xff]
    %v215 = vld [vmem:[%s0 + $0x650] sm:$0xff]
    %v216 = vld [vmem:[%s0 + $0x658] sm:$0xff]
    %v217 = vld [vmem:[%s0 + $0x660] sm:$0xff]
    %v218 = vld [vmem:[%s0 + $0x668] sm:$0xff]
    %v219 = vld [vmem:[%s0 + $0x670] sm:$0xff]
    %v220 = vld [vmem:[%s0 + $0x678] sm:$0xff]
    %v221 = vld [vmem:[%s0 + $0x680] sm:$0xff]
    %v222 = vld [vmem:[%s0 + $0x688] sm:$0xff]
    %v223 = vld [vmem:[%s0 + $0x690] sm:$0xff]
    %v224 = vld [vmem:[%s0 + $0x698] sm:$0xff]
    %v225 = vld [vmem:[%s0 + $0x6a0] sm:$0xff]
    %v226 = vld [vmem:[%s0 + $0x6a8] sm:$0xff]
    %v227 = vld [vmem:[%s0 + $0x6b0] sm:$0xff]
    %v228 = vld [vmem:[%s0 + $0x6b8] sm:$0xff]
    %v229 = vld [vmem:[%s0 + $0x6c0] sm:$0xff]
    %v230 = vld [vmem:[%s0 + $0x6c8] sm:$0xff]
    %v231 = vld [vmem:[%s0 + $0x6d0] sm:$0xff]
    %v232 = vld [vmem:[%s0 + $0x6d8] sm:$0xff]
    %v233 = vld [vmem:[%s0 + $0x6e0] sm:$0xff]
    %v234 = vld [vmem:[%s0 + $0x6e8] sm:$0xff]
    %v235 = vld [vmem:[%s0 + $0x6f0] sm:$0xff]
    %v236 = vld [vmem:[%s0 + $0x6f8] sm:$0xff]
    %v237 = vld [vmem:[%s0 + $0x700] sm:$0xff]
    %v238 = vld [vmem:[%s0 + $0x708] sm:$0xff]
    %v239 = vld [vmem:[%s0 + $0x710] sm:$0xff]
    %v240 = vld [vmem:[%s0 + $0x718] sm:$0xff]
    %v241 = vld [vmem:[%s0 + $0x720] sm:$0xff]
    %v242 = vld [vmem:[%s0 + $0x728] sm:$0xff]
    %v243 = vld [vmem:[%s0 + $0x730] sm:$0xff]
    %v244 = vld [vmem:[%s0 + $0x738] sm:$0xff]
    %v245 = vld [vmem:[%s0 + $0x740] sm:$0xff]
    %v246 = vld [vmem:[%s0 + $0x748] sm:$0xff]
    %v247 = vld [vmem:[%s0 + $0x750] sm:$0xff]
    %v248 = vld [vmem:[%s0 + $0x758] sm:$0xff]
    %v249 = vld [vmem:[%s0 + $0x760] sm:$0xff]
    %v250 = vld [vmem:[%s0 + $0x768] sm:$0xff]
    %v251 = vld [vmem:[%s0 + $0x770] sm:$0xff]
    %v252 = vld [vmem:[%s0 + $0x778] sm:$0xff]
    %v253 = vld [vmem:[%s0 + $0x780] sm:$0xff]
    %v254 = vld [vmem:[%s0 + $0x788] sm:$0xff]
    %v255 = vld [vmem:[%s0 + $0x790] sm:$0xff]
    %v256 = vld [vmem:[%s0 + $0x798] sm:$0xff]
    %v257 = vld [vmem:[%s0 + $0x7a0] sm:$0xff]
    %v258 = vld [vmem:[%s0 + $0x7a8] sm:$0xff]
    %v259 = vld [vmem:[%s0 + $0x7b0] sm:$0xff]
    %v260 = vld [vmem:[%s0 + $0x7b8] sm:$0xff]
    %v261 = vld [vmem:[%s0 + $0x7c0] sm:$0xff]
    %v262 = vld [vmem:[%s0 + $0x7c8] sm:$0xff]
    %v263 = vld [vmem:[%s0 + $0x7d0] sm:$0xff]
    %v264 = vld [vmem:[%s0 + $0x7d8] sm:$0xff]
    %v265 = vld [vmem:[%s0 + $0x7e0] sm:$0xff]
    %v266 = vld [vmem:[%s0 + $0x7e8] sm:$0xff]
    %v267 = vld [vmem:[%s0 + $0x7f0] sm:$0xff]
    %v268 = vld [vmem:[%s0 + $0x7f8] sm:$0xff]
    %v269 = vld [vmem:[%s0 + $0x800] sm:$0xff]
    %v270 = vld [vmem:[%s0 + $0x808] sm:$0xff]
    %v271 = vld [vmem:[%s0 + $0x810] sm:$0xff]
    %v272 = vld [vmem:[%s0 + $0x818] sm:$0xff]
    %v273 = vld [vmem:[%s0 + $0x820] sm:$0xff]
    %v274 = vld [vmem:[%s0 + $0x828] sm:$0xff]
    %v275 = vld [vmem:[%s0 + $0x830] sm:$0xff]
    %v276 = vld [vmem:[%s0 + $0x838] sm:$0xff]
    %v277 = vld [vmem:[%s0 + $0x840] sm:$0xff]
    %v278 = vld [vmem:[%s0 + $0x848] sm:$0xff]
    %v279 = vld [vmem:[%s0 + $0x850] sm:$0xff]
    %v280 = vld [vmem:[%s0 + $0x858] sm:$0xff]
    %v281 = vld [vmem:[%s0 + $0x860] sm:$0xff]
    %v282 = vld [vmem:[%s0 + $0x868] sm:$0xff]
    %v283 = vld [vmem:[%s0 + $0x870] sm:$0xff]
    %v284 = vld [vmem:[%s0 + $0x878] sm:$0xff]
    %v285 = vld [vmem:[%s0 + $0x880] sm:$0xff]
    %v286 = vld [vmem:[%s0 + $0x888] sm:$0xff]
    %v287 = vld [vmem:[%s0 + $0x890] sm:$0xff]
    %v288 = vld [vmem:[%s0 + $0x898] sm:$0xff]
    %v289 = vld [vmem:[%s0 + $0x8a0] sm:$0xff]
    %v290 = vld [vmem:[%s0 + $0x8a8] sm:$0xff]
    %v291 = vld [vmem:[%s0 + $0x8b0] sm:$0xff]
    %v292 = vld [vmem:[%s0 + $0x8b8] sm:$0xff]
    %v293 = vld [vmem:[%s0 + $0x8c0] sm:$0xff]
    %v294 = vld [vmem:[%s0 + $0x8c8] sm:$0xff]
    %v295 = vld [vmem:[%s0 + $0x8d0] sm:$0xff]
    %v296 = vld [vmem:[%s0 + $0x8d8] sm:$0xff]
    %v297 = vld [vmem:[%s0 + $0x8e0] sm:$0xff]
    %v298 = vld [vmem:[%s0 + $0x8e8] sm:$0xff]
    %v299 = vld [vmem:[%s0 + $0x8f0] sm:$0xff]
    %v300 = vld [vmem:[%s0 + $0x8f8] sm:$0xff]
    %v301 = vld [vmem:[%s0 + $0x900] sm:$0xff]
    %v302 = vld [vmem:[%s0 + $0x908] sm:$0xff]
    %v303 = vld [vmem:[%s0 + $0x910] sm:$0xff]
    %v304 = vld [vmem:[%s0 + $0x918] sm:$0xff]
    %v305 = vld [vmem:[%s0 + $0x920] sm:$0xff]
    %v306 = vld [vmem:[%s0 + $0x928] sm:$0xff]
    %v307 = vld [vmem:[%s0 + $0x930] sm:$0xff]
    %v308 = vld [vmem:[%s0 + $0x938] sm:$0xff]
    %v309 = vld [vmem:[%s0 + $0x940] sm:$0xff]
    %v310 = vld [vmem:[%s0 + $0x948] sm:$0xff]
    %v311 = vld [vmem:[%s0 + $0x950] sm:$0xff]
    %v312 = vld [vmem:[%s0 + $0x958] sm:$0xff]
    %v313 = vld [vmem:[%s0 + $0x960] sm:$0xff]
    %v314 = vld [vmem:[%s0 + $0x968] sm:$0xff]
    %v315 = vld [vmem:[%s0 + $0x970] sm:$0xff]
    %v316 = vld [vmem:[%s0 + $0x978] sm:$0xff]
    %v317 = vld [vmem:[%s0 + $0x980] sm:$0xff]
    %v318 = vld [vmem:[%s0 + $0x988] sm:$0xff]
    %v319 = vld [vmem:[%s0 + $0x990] sm:$0xff]
    %v320 = vld [vmem:[%s0 + $0x998] sm:$0xff]
    %v321 = vld [vmem:[%s0 + $0x9a0] sm:$0xff]
    %v322 = vld [vmem:[%s0 + $0x9a8] sm:$0xff]
    %v323 = vld [vmem:[%s0 + $0x9b0] sm:$0xff]
    %v324 = vld [vmem:[%s0 + $0x9b8] sm:$0xff]
    %v325 = vld [vmem:[%s0 + $0x9c0] sm:$0xff]
    %v326 = vld [vmem:[%s0 + $0x9c8] sm:$0xff]
    %v327 = vld [vmem:[%s0 + $0x9d0] sm:$0xff]
    %v328 = vld [vmem:[%s0 + $0x9d8] sm:$0xff]
    %v329 = vld [vmem:[%s0 + $0x9e0] sm:$0xff]
    %v330 = vld [vmem:[%s0 + $0x9e8] sm:$0xff]
    %v331 = vld [vmem:[%s0 + $0x9f0] sm:$0xff]
    %v332 = vld [vmem:[%s0 + $0x9f8] sm:$0xff]
    %v333 = vld [vmem:[%s0 + $0xa00] sm:$0xff]
    %v334 = vld [vmem:[%s0 + $0xa08] sm:$0xff]
    %v335 = vld [vmem:[%s0 + $0xa10] sm:$0xff]
    %v336 = vld [vmem:[%s0 + $0xa18] sm:$0xff]
    %v337 = vld [vmem:[%s0 + $0xa20] sm:$0xff]
    %v338 = vld [vmem:[%s0 + $0xa28] sm:$0xff]
    %v339 = vld [vmem:[%s0 + $0xa30] sm:$0xff]
    %v340 = vld [vmem:[%s0 + $0xa38] sm:$0xff]
    %v341 = vld [vmem:[%s0 + $0xa40] sm:$0xff]
    %v342 = vld [vmem:[%s0 + $0xa48] sm:$0xff]
    %v343 = vld [vmem:[%s0 + $0xa50] sm:$0xff]
    %v344 = vld [vmem:[%s0 + $0xa58] sm:$0xff]
    %v345 = vld [vmem:[%s0 + $0xa60] sm:$0xff]
    %v346 = vld [vmem:[%s0 + $0xa68] sm:$0xff]
    %v347 = vld [vmem:[%s0 + $0xa70] sm:$0xff]
    %v348 = vld [vmem:[%s0 + $0xa78] sm:$0xff]
    %v349 = vld [vmem:[%s0 + $0xa80] sm:$0xff]
    %v350 = vld [vmem:[%s0 + $0xa88] sm:$0xff]
    %v351 = vld [vmem:[%s0 + $0xa90] sm:$0xff]
    %v352 = vld [vmem:[%s0 + $0xa98] sm:$0xff]
    %v353 = vld [vmem:[%s0 + $0xaa0] sm:$0xff]
    %v354 = vld [vmem:[%s0 + $0xaa8] sm:$0xff]
    %v355 = vld [vmem:[%s0 + $0xab0] sm:$0xff]
    %v356 = vld [vmem:[%s0 + $0xab8] sm:$0xff]
    %v357 = vld [vmem:[%s0 + $0xac0] sm:$0xff]
    %v358 = vld [vmem:[%s0 + $0xac8] sm:$0xff]
    %v359 = vld [vmem:[%s0 + $0xad0] sm:$0xff]
    %v360 = vld [vmem:[%s0 + $0xad8] sm:$0xff]
    %v361 = vld [vmem:[%s0 + $0xae0] sm:$0xff]
    %v362 = vld [vmem:[%s0 + $0xae8] sm:$0xff]
    %v363 = vld [vmem:[%s0 + $0xaf0] sm:$0xff]
    %v364 = vld [vmem:[%s0 + $0xaf8] sm:$0xff]
    %v365 = vld [vmem:[%s0 + $0xb00] sm:$0xff]
    %v366 = vld [vmem:[%s0 + $0xb08] sm:$0xff]
    %v367 = vld [vmem:[%s0 + $0xb10] sm:$0xff]
    %v368 = vld [vmem:[%s0 + $0xb18] sm:$0xff]
    %v369 = vld [vmem:[%s0 + $0xb20] sm:$0xff]
    %v370 = vld [vmem:[%s0 + $0xb28] sm:$0xff]
    %v371 = vld [vmem:[%s0 + $0xb30] sm:$0xff]
    %v372 = vld [vmem:[%s0 + $0xb38] sm:$0xff]
    %v373 = vld [vmem:[%s0 + $0xb40] sm:$0xff]
    %v374 = vld [vmem:[%s0 + $0xb48] sm:$0xff]
    %v375 = vld [vmem:[%s0 + $0xb50] sm:$0xff]
    %v376 = vld [vmem:[%s0 + $0xb58] sm:$0xff]
    %v377 = vld [vmem:[%s0 + $0xb60] sm:$0xff]
    %v378 = vld [vmem:[%s0 + $0xb68] sm:$0xff]
    %v379 = vld [vmem:[%s0 + $0xb70] sm:$0xff]
    %v380 = vld [vmem:[%s0 + $0xb78] sm:$0xff]
    %v381 = vld [vmem:[%s0 + $0xb80] sm:$0xff]
    %v382 = vld [vmem:[%s0 + $0xb88] sm:$0xff]
    %v383 = vld [vmem:[%s0 + $0xb90] sm:$0xff]
    %v384 = vld [vmem:[%s0 + $0xb98] sm:$0xff]
    %v385 = vld [vmem:[%s0 + $0xba0] sm:$0xff]
    %v386 = vld [vmem:[%s0 + $0xba8] sm:$0xff]
    %v387 = vld [vmem:[%s0 + $0xbb0] sm:$0xff]
    %v388 = vld [vmem:[%s0 + $0xbb8] sm:$0xff]
    %v389 = vld [vmem:[%s0 + $0xbc0] sm:$0xff]
    %v390 = vld [vmem:[%s0 + $0xbc8] sm:$0xff]
    %v391 = vld [vmem:[%s0 + $0xbd0] sm:$0xff]
    %v392 = vld [vmem:[%s0 + $0xbd8] sm:$0xff]
    %v393 = vld [vmem:[%s0 + $0xbe0] sm:$0xff]
    %v394 = vld [vmem:[%s0 + $0xbe8] sm:$0xff]
    %v395 = vld [vmem:[%s0 + $0xbf0] sm:$0xff]
    %v396 = vld [vmem:[%s0 + $0xbf8] sm:$0xff]
    %v397 = vld [vmem:[%s0 + $0xc00] sm:$0xff]
    %v398 = vld [vmem:[%s0 + $0xc08] sm:$0xff]
    %v399 = vld [vmem:[%s0 + $0xc10] sm:$0xff]
    %v400 = vld [vmem:[%s0 + $0xc18] sm:$0xff]
    %v401 = vld [vmem:[%s0 + $0xc20] sm:$0xff]
    %v402 = vld [vmem:[%s0 + $0xc28] sm:$0xff]
    %v403 = vld [vmem:[%s0 + $0xc30] sm:$0xff]
    %v404 = vld [vmem:[%s0 + $0xc38] sm:$0xff]
    %v405 = vld [vmem:[%s0 + $0xc40] sm:$0xff]
    %v406 = vld [vmem:[%s0 + $0xc48] sm:$0xff]
    %v407 = vld [vmem:[%s0 + $0xc50] sm:$0xff]
    %v408 = vld [vmem:[%s0 + $0xc58] sm:$0xff]
    %v409 = vld [vmem:[%s0 + $0xc60] sm:$0xff]
    %v410 = vld [vmem:[%s0 + $0xc68] sm:$0xff]
    %v411 = vld [vmem:[%s0 + $0xc70] sm:$0xff]
    %v412 = vld [vmem:[%s0 + $0xc78] sm:$0xff]
    %v413 = vld [vmem:[%s0 + $0xc80] sm:$0xff]
    %v414 = vld [vmem:[%s0 + $0xc88] sm:$0xff]
    %v415 = vld [vmem:[%s0 + $0xc90] sm:$0xff]
    %v416 = vld [vmem:[%s0 + $0xc98] sm:$0xff]
    %v417 = vld [vmem:[%s0 + $0xca0] sm:$0xff]
    %v418 = vld [vmem:[%s0 + $0xca8] sm:$0xff]
    %v419 = vld [vmem:[%s0 + $0xcb0] sm:$0xff]
    %v420 = vld [vmem:[%s0 + $0xcb8] sm:$0xff]
    %v421 = vld [vmem:[%s0 + $0xcc0] sm:$0xff]
    %v422 = vld [vmem:[%s0 + $0xcc8] sm:$0xff]
    %v423 = vld [vmem:[%s0 + $0xcd0] sm:$0xff]
    %v424 = vld [vmem:[%s0 + $0xcd8] sm:$0xff]
    %v425 = vld [vmem:[%s0 + $0xce0] sm:$0xff]
    %v426 = vld [vmem:[%s0 + $0xce8] sm:$0xff]
    %v427 = vld [vmem:[%s0 + $0xcf0] sm:$0xff]
    %v428 = vld [vmem:[%s0 + $0xcf8] sm:$0xff]
    %v429 = vld [vmem:[%s0 + $0xd00] sm:$0xff]
    %v430 = vld [vmem:[%s0 + $0xd08] sm:$0xff]
    %v431 = vld [vmem:[%s0 + $0xd10] sm:$0xff]
    %v432 = vld [vmem:[%s0 + $0xd18] sm:$0xff]
    %v433 = vpack.c.bf16 %v20, %v13
    %v434 = vpack.c.bf16 %v21, %v14
    %v435 = vpack.c.bf16 %v22, %v15
    %v436 = vpack.c.bf16 %v23, %v16
    %v437 = vpack.c.bf16 %v24, %v17
    %v438 = vpack.c.bf16 %v25, %v18
    %v439 = vpack.c.bf16 %v26, %v19
    %v440 = vpack.c.bf16 %v34, %v27
    %v441 = vpack.c.bf16 %v35, %v28
    %v442 = vpack.c.bf16 %v36, %v29
    %v443 = vpack.c.bf16 %v37, %v30
    %v444 = vpack.c.bf16 %v38, %v31
    %v445 = vpack.c.bf16 %v39, %v32
    %v446 = vpack.c.bf16 %v40, %v33
    %v447 = vpack.c.bf16 %v48, %v41
    %v448 = vpack.c.bf16 %v49, %v42
    %v449 = vpack.c.bf16 %v50, %v43
    %v450 = vpack.c.bf16 %v51, %v44
    %v451 = vpack.c.bf16 %v52, %v45
    %v452 = vpack.c.bf16 %v53, %v46
    %v453 = vpack.c.bf16 %v54, %v47
    %v454 = vpack.c.bf16 %v62, %v55
    %v455 = vpack.c.bf16 %v63, %v56
    %v456 = vpack.c.bf16 %v64, %v57
    %v457 = vpack.c.bf16 %v65, %v58
    %v458 = vpack.c.bf16 %v66, %v59
    %v459 = vpack.c.bf16 %v67, %v60
    %v460 = vpack.c.bf16 %v68, %v61
    %v461 = vpack.c.bf16 %v76, %v69
    %v462 = vpack.c.bf16 %v77, %v70
    %v463 = vpack.c.bf16 %v78, %v71
    %v464 = vpack.c.bf16 %v79, %v72
    %v465 = vpack.c.bf16 %v80, %v73
    %v466 = vpack.c.bf16 %v81, %v74
    %v467 = vpack.c.bf16 %v82, %v75
    %v468 = vpack.c.bf16 %v90, %v83
    %v469 = vpack.c.bf16 %v91, %v84
    %v470 = vpack.c.bf16 %v92, %v85
    %v471 = vpack.c.bf16 %v93, %v86
    %v472 = vpack.c.bf16 %v94, %v87
    %v473 = vpack.c.bf16 %v95, %v88
    %v474 = vpack.c.bf16 %v96, %v89
    %v475 = vpack.c.bf16 %v104, %v97
    %v476 = vpack.c.bf16 %v105, %v98
    %v477 = vpack.c.bf16 %v106, %v99
    %v478 = vpack.c.bf16 %v107, %v100
    %v479 = vpack.c.bf16 %v108, %v101
    %v480 = vpack.c.bf16 %v109, %v102
    %v481 = vpack.c.bf16 %v110, %v103
    %v482 = vpack.c.bf16 %v118, %v111
    %v483 = vpack.c.bf16 %v119, %v112
    %v484 = vpack.c.bf16 %v120, %v113
    %v485 = vpack.c.bf16 %v121, %v114
    %v486 = vpack.c.bf16 %v122, %v115
    %v487 = vpack.c.bf16 %v123, %v116
    %v488 = vpack.c.bf16 %v124, %v117
    %v489 = vpack.c.bf16 %v132, %v125
    %v490 = vpack.c.bf16 %v133, %v126
    %v491 = vpack.c.bf16 %v134, %v127
    %v492 = vpack.c.bf16 %v135, %v128
    %v493 = vpack.c.bf16 %v136, %v129
    %v494 = vpack.c.bf16 %v137, %v130
    %v495 = vpack.c.bf16 %v138, %v131
    %v496 = vpack.c.bf16 %v146, %v139
    %v497 = vpack.c.bf16 %v147, %v140
    %v498 = vpack.c.bf16 %v148, %v141
    %v499 = vpack.c.bf16 %v149, %v142
    %v500 = vpack.c.bf16 %v150, %v143
    %v501 = vpack.c.bf16 %v151, %v144
    %v502 = vpack.c.bf16 %v152, %v145
    %v503 = vpack.c.bf16 %v160, %v153
    %v504 = vpack.c.bf16 %v161, %v154
    %v505 = vpack.c.bf16 %v162, %v155
    %v506 = vpack.c.bf16 %v163, %v156
    %v507 = vpack.c.bf16 %v164, %v157
    %v508 = vpack.c.bf16 %v165, %v158
    %v509 = vpack.c.bf16 %v166, %v159
    %v510 = vpack.c.bf16 %v174, %v167
    %v511 = vpack.c.bf16 %v175, %v168
    %v512 = vpack.c.bf16 %v176, %v169
    %v513 = vpack.c.bf16 %v177, %v170
    %v514 = vpack.c.bf16 %v178, %v171
    %v515 = vpack.c.bf16 %v179, %v172
    %v516 = vpack.c.bf16 %v180, %v173
    %v517 = vpack.c.bf16 %v188, %v181
    %v518 = vpack.c.bf16 %v189, %v182
    %v519 = vpack.c.bf16 %v190, %v183
    %v520 = vpack.c.bf16 %v191, %v184
    %v521 = vpack.c.bf16 %v192, %v185
    %v522 = vpack.c.bf16 %v193, %v186
    %v523 = vpack.c.bf16 %v194, %v187
    %v524 = vpack.c.bf16 %v202, %v195
    %v525 = vpack.c.bf16 %v203, %v196
    %v526 = vpack.c.bf16 %v204, %v197
    %v527 = vpack.c.bf16 %v205, %v198
    %v528 = vpack.c.bf16 %v206, %v199
    %v529 = vpack.c.bf16 %v207, %v200
    %v530 = vpack.c.bf16 %v208, %v201
    %v531 = vpack.c.bf16 %v216, %v209
    %v532 = vpack.c.bf16 %v217, %v210
    %v533 = vpack.c.bf16 %v218, %v211
    %v534 = vpack.c.bf16 %v219, %v212
    %v535 = vpack.c.bf16 %v220, %v213
    %v536 = vpack.c.bf16 %v221, %v214
    %v537 = vpack.c.bf16 %v222, %v215
    %v538 = vpack.c.bf16 %v230, %v223
    %v539 = vpack.c.bf16 %v231, %v224
    %v540 = vpack.c.bf16 %v232, %v225
    %v541 = vpack.c.bf16 %v233, %v226
    %v542 = vpack.c.bf16 %v234, %v227
    %v543 = vpack.c.bf16 %v235, %v228
    %v544 = vpack.c.bf16 %v236, %v229
    %v545 = vpack.c.bf16 %v244, %v237
    %v546 = vpack.c.bf16 %v245, %v238
    %v547 = vpack.c.bf16 %v246, %v239
    %v548 = vpack.c.bf16 %v247, %v240
    %v549 = vpack.c.bf16 %v248, %v241
    %v550 = vpack.c.bf16 %v249, %v242
    %v551 = vpack.c.bf16 %v250, %v243
    %v552 = vpack.c.bf16 %v258, %v251
    %v553 = vpack.c.bf16 %v259, %v252
    %v554 = vpack.c.bf16 %v260, %v253
    %v555 = vpack.c.bf16 %v261, %v254
    %v556 = vpack.c.bf16 %v262, %v255
    %v557 = vpack.c.bf16 %v263, %v256
    %v558 = vpack.c.bf16 %v264, %v257
    %v559 = vpack.c.bf16 %v272, %v265
    %v560 = vpack.c.bf16 %v273, %v266
    %v561 = vpack.c.bf16 %v274, %v267
    %v562 = vpack.c.bf16 %v275, %v268
    %v563 = vpack.c.bf16 %v276, %v269
    %v564 = vpack.c.bf16 %v277, %v270
    %v565 = vpack.c.bf16 %v278, %v271
    %v566 = vpack.c.bf16 %v286, %v279
    %v567 = vpack.c.bf16 %v287, %v280
    %v568 = vpack.c.bf16 %v288, %v281
    %v569 = vpack.c.bf16 %v289, %v282
    %v570 = vpack.c.bf16 %v290, %v283
    %v571 = vpack.c.bf16 %v291, %v284
    %v572 = vpack.c.bf16 %v292, %v285
    %v573 = vpack.c.bf16 %v300, %v293
    %v574 = vpack.c.bf16 %v301, %v294
    %v575 = vpack.c.bf16 %v302, %v295
    %v576 = vpack.c.bf16 %v303, %v296
    %v577 = vpack.c.bf16 %v304, %v297
    %v578 = vpack.c.bf16 %v305, %v298
    %v579 = vpack.c.bf16 %v306, %v299
    %v580 = vpack.c.bf16 %v314, %v307
    %v581 = vpack.c.bf16 %v315, %v308
    %v582 = vpack.c.bf16 %v316, %v309
    %v583 = vpack.c.bf16 %v317, %v310
    %v584 = vpack.c.bf16 %v318, %v311
    %v585 = vpack.c.bf16 %v319, %v312
    %v586 = vpack.c.bf16 %v320, %v313
    %v587 = vpack.c.bf16 %v328, %v321
    %v588 = vpack.c.bf16 %v329, %v322
    %v589 = vpack.c.bf16 %v330, %v323
    %v590 = vpack.c.bf16 %v331, %v324
    %v591 = vpack.c.bf16 %v332, %v325
    %v592 = vpack.c.bf16 %v333, %v326
    %v593 = vpack.c.bf16 %v334, %v327
    %v594 = vpack.c.bf16 %v342, %v335
    %v595 = vpack.c.bf16 %v343, %v336
    %v596 = vpack.c.bf16 %v344, %v337
    %v597 = vpack.c.bf16 %v345, %v338
    %v598 = vpack.c.bf16 %v346, %v339
    %v599 = vpack.c.bf16 %v347, %v340
    %v600 = vpack.c.bf16 %v348, %v341
    %v601 = vpack.c.bf16 %v356, %v349
    %v602 = vpack.c.bf16 %v357, %v350
    %v603 = vpack.c.bf16 %v358, %v351
    %v604 = vpack.c.bf16 %v359, %v352
    %v605 = vpack.c.bf16 %v360, %v353
    %v606 = vpack.c.bf16 %v361, %v354
    %v607 = vpack.c.bf16 %v362, %v355
    %v608 = vpack.c.bf16 %v370, %v363
    %v609 = vpack.c.bf16 %v371, %v364
    %v610 = vpack.c.bf16 %v372, %v365
    %v611 = vpack.c.bf16 %v373, %v366
    %v612 = vpack.c.bf16 %v374, %v367
    %v613 = vpack.c.bf16 %v375, %v368
    %v614 = vpack.c.bf16 %v376, %v369
    %v615 = vpack.c.bf16 %v384, %v377
    %v616 = vpack.c.bf16 %v385, %v378
    %v617 = vpack.c.bf16 %v386, %v379
    %v618 = vpack.c.bf16 %v387, %v380
    %v619 = vpack.c.bf16 %v388, %v381
    %v620 = vpack.c.bf16 %v389, %v382
    %v621 = vpack.c.bf16 %v390, %v383
    %v622 = vpack.c.bf16 %v398, %v391
    %v623 = vpack.c.bf16 %v399, %v392
    %v624 = vpack.c.bf16 %v400, %v393
    %v625 = vpack.c.bf16 %v401, %v394
    %v626 = vpack.c.bf16 %v402, %v395
    %v627 = vpack.c.bf16 %v403, %v396
    %v628 = vpack.c.bf16 %v404, %v397
    %v629 = vpack.c.bf16 %v412, %v405
    %v630 = vpack.c.bf16 %v413, %v406
    %v631 = vpack.c.bf16 %v414, %v407
    %v632 = vpack.c.bf16 %v415, %v408
    %v633 = vpack.c.bf16 %v416, %v409
    %v634 = vpack.c.bf16 %v417, %v410
    %v635 = vpack.c.bf16 %v418, %v411
    %v636 = vpack.c.bf16 %v426, %v419
    %v637 = vpack.c.bf16 %v427, %v420
    %v638 = vpack.c.bf16 %v428, %v421
    %v639 = vpack.c.bf16 %v429, %v422
    %v640 = vpack.c.bf16 %v430, %v423
    %v641 = vpack.c.bf16 %v431, %v424
    %v642 = vpack.c.bf16 %v432, %v425
    %v643 = vld [vmem:[%s1] sm:$0xff]
    %v644 = vld [vmem:[%s1 + $0x8] sm:$0xff]
    %v645 = vld [vmem:[%s1 + $0x10] sm:$0xff]
    %v646 = vld [vmem:[%s1 + $0x18] sm:$0xff]
    %v647 = vld [vmem:[%s1 + $0x20] sm:$0xff]
    %v648 = vld [vmem:[%s1 + $0x28] sm:$0xff]
    %v649 = vld [vmem:[%s1 + $0x30] sm:$0xff]
    %v650 = vld [vmem:[%s1 + $0x38] sm:$0xff]
    %v651 = vld [vmem:[%s1 + $0x40] sm:$0xff]
    %v652 = vld [vmem:[%s1 + $0x48] sm:$0xff]
    %v653 = vld [vmem:[%s1 + $0x50] sm:$0xff]
    %v654 = vld [vmem:[%s1 + $0x58] sm:$0xff]
    %v655 = vld [vmem:[%s1 + $0x60] sm:$0xff]
    %v656 = vld [vmem:[%s1 + $0x68] sm:$0xff]
    %v657 = vld [vmem:[%s1 + $0x70] sm:$0xff]
    %v658 = vld [vmem:[%s1 + $0x78] sm:$0xff]
    %v659 = vld [vmem:[%s1 + $0x80] sm:$0xff]
    %v660 = vld [vmem:[%s1 + $0x88] sm:$0xff]
    %v661 = vld [vmem:[%s1 + $0x90] sm:$0xff]
    %v662 = vld [vmem:[%s1 + $0x98] sm:$0xff]
    %v663 = vld [vmem:[%s1 + $0xa0] sm:$0xff]
    %v664 = vld [vmem:[%s1 + $0xa8] sm:$0xff]
    %v665 = vld [vmem:[%s1 + $0xb0] sm:$0xff]
    %v666 = vld [vmem:[%s1 + $0xb8] sm:$0xff]
    %v667 = vld [vmem:[%s1 + $0xc0] sm:$0xff]
    %v668 = vld [vmem:[%s1 + $0xc8] sm:$0xff]
    %v669 = vld [vmem:[%s1 + $0xd0] sm:$0xff]
    %v670 = vld [vmem:[%s1 + $0xd8] sm:$0xff]
    %v671 = vld [vmem:[%s1 + $0xe0] sm:$0xff]
    %v672 = vld [vmem:[%s1 + $0xe8] sm:$0xff]
    %v673 = vld [vmem:[%s1 + $0xf0] sm:$0xff]
    %v674 = vld [vmem:[%s1 + $0xf8] sm:$0xff]
    %v675 = vld [vmem:[%s1 + $0x100] sm:$0xff]
    %v676 = vld [vmem:[%s1 + $0x108] sm:$0xff]
    %v677 = vld [vmem:[%s1 + $0x110] sm:$0xff]
    %v678 = vld [vmem:[%s1 + $0x118] sm:$0xff]
    %v679 = vld [vmem:[%s1 + $0x120] sm:$0xff]
    %v680 = vld [vmem:[%s1 + $0x128] sm:$0xff]
    %v681 = vld [vmem:[%s1 + $0x130] sm:$0xff]
    %v682 = vld [vmem:[%s1 + $0x138] sm:$0xff]
    %v683 = vpack.c.bf16 %v647, %v643
    %v684 = vpack.c.bf16 %v648, %v644
    %v685 = vpack.c.bf16 %v649, %v645
    %v686 = vpack.c.bf16 %v650, %v646
    %v687 = vpack.c.bf16 %v655, %v651
    %v688 = vpack.c.bf16 %v656, %v652
    %v689 = vpack.c.bf16 %v657, %v653
    %v690 = vpack.c.bf16 %v658, %v654
    %v691 = vpack.c.bf16 %v663, %v659
    %v692 = vpack.c.bf16 %v664, %v660
    %v693 = vpack.c.bf16 %v665, %v661
    %v694 = vpack.c.bf16 %v666, %v662
    %v695 = vpack.c.bf16 %v671, %v667
    %v696 = vpack.c.bf16 %v672, %v668
    %v697 = vpack.c.bf16 %v673, %v669
    %v698 = vpack.c.bf16 %v674, %v670
    %v699 = vpack.c.bf16 %v679, %v675
    %v700 = vpack.c.bf16 %v680, %v676
    %v701 = vpack.c.bf16 %v681, %v677
    %v702 = vpack.c.bf16 %v682, %v678
    %vm703 = vcmask 785408
    %v705 = vsel %vm703, %v686, 0
    %v708 = vsel %vm703, %v690, 0
    %v711 = vsel %vm703, %v694, 0
    %v714 = vsel %vm703, %v698, 0
    %v717 = vsel %vm703, %v702, 0
    %719 = vmatprep.subr.bf16.mxu0 %v483
    %720 = vmatpush1.bf16.msra.mxu0 %v482
    %721 = vmatprep.subr.bf16.mxu0 %v476
    %722 = vmatpush1.bf16.msra.mxu0 %v475
    %723 = vmatprep.subr.bf16.mxu0 %v469
    %724 = vmatpush1.bf16.msra.mxu0 %v468
    %725 = vmatprep.subr.bf16.mxu0 %v462
    %726 = vmatpush1.bf16.msra.mxu0 %v461
    %727 = vmatprep.subr.bf16.mxu0 %v455
    %728 = vmatpush1.bf16.msra.mxu0 %v454
    %729 = vmatprep.subr.bf16.mxu0 %v448
    %730 = vmatpush1.bf16.msra.mxu0 %v447
    %731 = vmatprep.subr.bf16.mxu0 %v441
    %732 = vmatpush1.bf16.msra.mxu0 %v440
    %733 = vmatprep.subr.bf16.mxu0 %v434
    %734 = vmatpush1.bf16.msra.mxu0 %v433
    %735 = vmatprep.subr.bf16.mxu0 %v539
    %736 = vmatpush2.bf16.msra.mxu0 %v538
    %737 = vmatprep.subr.bf16.mxu0 %v532
    %738 = vmatpush2.bf16.msra.mxu0 %v531
    %739 = vmatprep.subr.bf16.mxu0 %v525
    %740 = vmatpush2.bf16.msra.mxu0 %v524
    %741 = vmatprep.subr.bf16.mxu0 %v518
    %742 = vmatpush2.bf16.msra.mxu0 %v517
    %743 = vmatprep.subr.bf16.mxu0 %v511
    %744 = vmatpush2.bf16.msra.mxu0 %v510
    %745 = vmatprep.subr.bf16.mxu0 %v504
    %746 = vmatpush2.bf16.msra.mxu0 %v503
    %747 = vmatprep.subr.bf16.mxu0 %v497
    %748 = vmatpush2.bf16.msra.mxu0 %v496
    %749 = vmatprep.subr.bf16.mxu0 %v490
    %750 = vmatpush2.bf16.msra.mxu0 %v489
    %751 = vmatprep.mubr.bf16.mxu0 %v684
    %752 = vmatmul.mubr.bf16.gmra.mxu0 %v683
    %v753 = vpop.f32.mrf.mxu0
    %v754 = vadd.f32 0.0, %v753
    %v755 = vpop.f32.mrf.mxu0
    %v756 = vadd.f32 0.0, %v755
    %v757 = vpop.f32.mrf.mxu0
    %v758 = vadd.f32 0.0, %v757
    %v759 = vpop.f32.mrf.mxu0
    %v760 = vadd.f32 0.0, %v759
    %761 = vmatprep.mubr.bf16.mxu0 %v688
    %762 = vmatmul.mubr.bf16.gmra.mxu0 %v687
    %v763 = vpop.f32.mrf.mxu0
    %v764 = vadd.f32 0.0, %v763
    %v765 = vpop.f32.mrf.mxu0
    %v766 = vadd.f32 0.0, %v765
    %v767 = vpop.f32.mrf.mxu0
    %v768 = vadd.f32 0.0, %v767
    %v769 = vpop.f32.mrf.mxu0
    %v770 = vadd.f32 0.0, %v769
    %771 = vmatprep.mubr.bf16.mxu0 %v692
    %772 = vmatmul.mubr.bf16.gmra.mxu0 %v691
    %v773 = vpop.f32.mrf.mxu0
    %v774 = vadd.f32 0.0, %v773
    %v775 = vpop.f32.mrf.mxu0
    %v776 = vadd.f32 0.0, %v775
    %v777 = vpop.f32.mrf.mxu0
    %v778 = vadd.f32 0.0, %v777
    %v779 = vpop.f32.mrf.mxu0
    %v780 = vadd.f32 0.0, %v779
    %781 = vmatprep.mubr.bf16.mxu0 %v696
    %782 = vmatmul.mubr.bf16.gmra.mxu0 %v695
    %v783 = vpop.f32.mrf.mxu0
    %v784 = vadd.f32 0.0, %v783
    %v785 = vpop.f32.mrf.mxu0
    %v786 = vadd.f32 0.0, %v785
    %v787 = vpop.f32.mrf.mxu0
    %v788 = vadd.f32 0.0, %v787
    %v789 = vpop.f32.mrf.mxu0
    %v790 = vadd.f32 0.0, %v789
    %791 = vmatprep.mubr.bf16.mxu0 %v700
    %792 = vmatmul.mubr.bf16.gmra.mxu0 %v699
    %v793 = vpop.f32.mrf.mxu0
    %v794 = vadd.f32 0.0, %v793
    %v795 = vpop.f32.mrf.mxu0
    %v796 = vadd.f32 0.0, %v795
    %v797 = vpop.f32.mrf.mxu0
    %v798 = vadd.f32 0.0, %v797
    %v799 = vpop.f32.mrf.mxu0
    %v800 = vadd.f32 0.0, %v799
    %801 = vdwg.mxu0
    %802 = vmatprep.subr.bf16.mxu0 %v595
    %803 = vmatpush1.bf16.msra.mxu0 %v594
    %804 = vmatprep.subr.bf16.mxu0 %v588
    %805 = vmatpush1.bf16.msra.mxu0 %v587
    %806 = vmatprep.subr.bf16.mxu0 %v581
    %807 = vmatpush1.bf16.msra.mxu0 %v580
    %808 = vmatprep.subr.bf16.mxu0 %v574
    %809 = vmatpush1.bf16.msra.mxu0 %v573
    %810 = vmatprep.subr.bf16.mxu0 %v567
    %811 = vmatpush1.bf16.msra.mxu0 %v566
    %812 = vmatprep.subr.bf16.mxu0 %v560
    %813 = vmatpush1.bf16.msra.mxu0 %v559
    %814 = vmatprep.subr.bf16.mxu0 %v553
    %815 = vmatpush1.bf16.msra.mxu0 %v552
    %816 = vmatprep.subr.bf16.mxu0 %v546
    %817 = vmatpush1.bf16.msra.mxu0 %v545
    %818 = vmatprep.subr.bf16.mxu0 0
    %819 = vmatpush2.bf16.msra.mxu0 0
    %820 = vmatprep.subr.bf16.mxu0 0
    %821 = vmatpush2.bf16.msra.mxu0 0
    %822 = vmatprep.subr.bf16.mxu0 %v637
    %823 = vmatpush2.bf16.msra.mxu0 %v636
    %824 = vmatprep.subr.bf16.mxu0 %v630
    %825 = vmatpush2.bf16.msra.mxu0 %v629
    %826 = vmatprep.subr.bf16.mxu0 %v623
    %827 = vmatpush2.bf16.msra.mxu0 %v622
    %828 = vmatprep.subr.bf16.mxu0 %v616
    %829 = vmatpush2.bf16.msra.mxu0 %v615
    %830 = vmatprep.subr.bf16.mxu0 %v609
    %831 = vmatpush2.bf16.msra.mxu0 %v608
    %832 = vmatprep.subr.bf16.mxu0 %v602
    %833 = vmatpush2.bf16.msra.mxu0 %v601
    %834 = vmatprep.mubr.bf16.mxu0 %v705
    %835 = vmatmul.mubr.bf16.gmra.mxu0 %v685
    %v836 = vpop.f32.mrf.mxu0
    %v837 = vadd.f32 %v754, %v836
    %v838 = vpop.f32.mrf.mxu0
    %v839 = vadd.f32 %v756, %v838
    %v840 = vpop.f32.mrf.mxu0
    %v841 = vadd.f32 %v758, %v840
    %v842 = vpop.f32.mrf.mxu0
    %v843 = vadd.f32 %v760, %v842
    %844 = vmatprep.mubr.bf16.mxu0 %v708
    %845 = vmatmul.mubr.bf16.gmra.mxu0 %v689
    %v846 = vpop.f32.mrf.mxu0
    %v847 = vadd.f32 %v764, %v846
    %v848 = vpop.f32.mrf.mxu0
    %v849 = vadd.f32 %v766, %v848
    %v850 = vpop.f32.mrf.mxu0
    %v851 = vadd.f32 %v768, %v850
    %v852 = vpop.f32.mrf.mxu0
    %v853 = vadd.f32 %v770, %v852
    %854 = vmatprep.mubr.bf16.mxu0 %v711
    %855 = vmatmul.mubr.bf16.gmra.mxu0 %v693
    %v856 = vpop.f32.mrf.mxu0
    %v857 = vadd.f32 %v774, %v856
    %v858 = vpop.f32.mrf.mxu0
    %v859 = vadd.f32 %v776, %v858
    %v860 = vpop.f32.mrf.mxu0
    %v861 = vadd.f32 %v778, %v860
    %v862 = vpop.f32.mrf.mxu0
    %v863 = vadd.f32 %v780, %v862
    %864 = vmatprep.mubr.bf16.mxu0 %v714
    %865 = vmatmul.mubr.bf16.gmra.mxu0 %v697
    %v866 = vpop.f32.mrf.mxu0
    %v867 = vadd.f32 %v784, %v866
    %v868 = vpop.f32.mrf.mxu0
    %v869 = vadd.f32 %v786, %v868
    %v870 = vpop.f32.mrf.mxu0
    %v871 = vadd.f32 %v788, %v870
    %v872 = vpop.f32.mrf.mxu0
    %v873 = vadd.f32 %v790, %v872
    %874 = vmatprep.mubr.bf16.mxu0 %v717
    %875 = vmatmul.mubr.bf16.gmra.mxu0 %v701
    %v876 = vpop.f32.mrf.mxu0
    %v877 = vadd.f32 %v794, %v876
    %v878 = vpop.f32.mrf.mxu0
    %v879 = vadd.f32 %v796, %v878
    %v880 = vpop.f32.mrf.mxu0
    %v881 = vadd.f32 %v798, %v880
    %v882 = vpop.f32.mrf.mxu0
    %v883 = vadd.f32 %v800, %v882
    %884 = vdwg.mxu0
    %885 = vmatprep.subr.bf16.mxu0 %v485
    %886 = vmatpush1.bf16.msra.mxu0 %v484
    %887 = vmatprep.subr.bf16.mxu0 %v478
    %888 = vmatpush1.bf16.msra.mxu0 %v477
    %889 = vmatprep.subr.bf16.mxu0 %v471
    %890 = vmatpush1.bf16.msra.mxu0 %v470
    %891 = vmatprep.subr.bf16.mxu0 %v464
    %892 = vmatpush1.bf16.msra.mxu0 %v463
    %893 = vmatprep.subr.bf16.mxu0 %v457
    %894 = vmatpush1.bf16.msra.mxu0 %v456
    %895 = vmatprep.subr.bf16.mxu0 %v450
    %896 = vmatpush1.bf16.msra.mxu0 %v449
    %897 = vmatprep.subr.bf16.mxu0 %v443
    %898 = vmatpush1.bf16.msra.mxu0 %v442
    %899 = vmatprep.subr.bf16.mxu0 %v436
    %900 = vmatpush1.bf16.msra.mxu0 %v435
    %901 = vmatprep.subr.bf16.mxu0 %v541
    %902 = vmatpush2.bf16.msra.mxu0 %v540
    %903 = vmatprep.subr.bf16.mxu0 %v534
    %904 = vmatpush2.bf16.msra.mxu0 %v533
    %905 = vmatprep.subr.bf16.mxu0 %v527
    %906 = vmatpush2.bf16.msra.mxu0 %v526
    %907 = vmatprep.subr.bf16.mxu0 %v520
    %908 = vmatpush2.bf16.msra.mxu0 %v519
    %909 = vmatprep.subr.bf16.mxu0 %v513
    %910 = vmatpush2.bf16.msra.mxu0 %v512
    %911 = vmatprep.subr.bf16.mxu0 %v506
    %912 = vmatpush2.bf16.msra.mxu0 %v505
    %913 = vmatprep.subr.bf16.mxu0 %v499
    %914 = vmatpush2.bf16.msra.mxu0 %v498
    %915 = vmatprep.subr.bf16.mxu0 %v492
    %916 = vmatpush2.bf16.msra.mxu0 %v491
    %917 = vmatprep.mubr.bf16.mxu0 %v684
    %918 = vmatmul.mubr.bf16.gmra.mxu0 %v683
    %v919 = vpop.f32.mrf.mxu0
    %v920 = vadd.f32 0.0, %v919
    %v921 = vpop.f32.mrf.mxu0
    %v922 = vadd.f32 0.0, %v921
    %v923 = vpop.f32.mrf.mxu0
    %v924 = vadd.f32 0.0, %v923
    %v925 = vpop.f32.mrf.mxu0
    %v926 = vadd.f32 0.0, %v925
    %927 = vmatprep.mubr.bf16.mxu0 %v688
    %928 = vmatmul.mubr.bf16.gmra.mxu0 %v687
    %v929 = vpop.f32.mrf.mxu0
    %v930 = vadd.f32 0.0, %v929
    %v931 = vpop.f32.mrf.mxu0
    %v932 = vadd.f32 0.0, %v931
    %v933 = vpop.f32.mrf.mxu0
    %v934 = vadd.f32 0.0, %v933
    %v935 = vpop.f32.mrf.mxu0
    %v936 = vadd.f32 0.0, %v935
    %937 = vmatprep.mubr.bf16.mxu0 %v692
    %938 = vmatmul.mubr.bf16.gmra.mxu0 %v691
    %v939 = vpop.f32.mrf.mxu0
    %v940 = vadd.f32 0.0, %v939
    %v941 = vpop.f32.mrf.mxu0
    %v942 = vadd.f32 0.0, %v941
    %v943 = vpop.f32.mrf.mxu0
    %v944 = vadd.f32 0.0, %v943
    %v945 = vpop.f32.mrf.mxu0
    %v946 = vadd.f32 0.0, %v945
    %947 = vmatprep.mubr.bf16.mxu0 %v696
    %948 = vmatmul.mubr.bf16.gmra.mxu0 %v695
    %v949 = vpop.f32.mrf.mxu0
    %v950 = vadd.f32 0.0, %v949
    %v951 = vpop.f32.mrf.mxu0
    %v952 = vadd.f32 0.0, %v951
    %v953 = vpop.f32.mrf.mxu0
    %v954 = vadd.f32 0.0, %v953
    %v955 = vpop.f32.mrf.mxu0
    %v956 = vadd.f32 0.0, %v955
    %957 = vmatprep.mubr.bf16.mxu0 %v700
    %958 = vmatmul.mubr.bf16.gmra.mxu0 %v699
    %v959 = vpop.f32.mrf.mxu0
    %v960 = vadd.f32 0.0, %v959
    %v961 = vpop.f32.mrf.mxu0
    %v962 = vadd.f32 0.0, %v961
    %v963 = vpop.f32.mrf.mxu0
    %v964 = vadd.f32 0.0, %v963
    %v965 = vpop.f32.mrf.mxu0
    %v966 = vadd.f32 0.0, %v965
    %967 = vdwg.mxu0
    %968 = vmatprep.subr.bf16.mxu0 %v597
    %969 = vmatpush1.bf16.msra.mxu0 %v596
    %970 = vmatprep.subr.bf16.mxu0 %v590
    %971 = vmatpush1.bf16.msra.mxu0 %v589
    %972 = vmatprep.subr.bf16.mxu0 %v583
    %973 = vmatpush1.bf16.msra.mxu0 %v582
    %974 = vmatprep.subr.bf16.mxu0 %v576
    %975 = vmatpush1.bf16.msra.mxu0 %v575
    %976 = vmatprep.subr.bf16.mxu0 %v569
    %977 = vmatpush1.bf16.msra.mxu0 %v568
    %978 = vmatprep.subr.bf16.mxu0 %v562
    %979 = vmatpush1.bf16.msra.mxu0 %v561
    %980 = vmatprep.subr.bf16.mxu0 %v555
    %981 = vmatpush1.bf16.msra.mxu0 %v554
    %982 = vmatprep.subr.bf16.mxu0 %v548
    %983 = vmatpush1.bf16.msra.mxu0 %v547
    %984 = vmatprep.subr.bf16.mxu0 0
    %985 = vmatpush2.bf16.msra.mxu0 0
    %986 = vmatprep.subr.bf16.mxu0 0
    %987 = vmatpush2.bf16.msra.mxu0 0
    %988 = vmatprep.subr.bf16.mxu0 %v639
    %989 = vmatpush2.bf16.msra.mxu0 %v638
    %990 = vmatprep.subr.bf16.mxu0 %v632
    %991 = vmatpush2.bf16.msra.mxu0 %v631
    %992 = vmatprep.subr.bf16.mxu0 %v625
    %993 = vmatpush2.bf16.msra.mxu0 %v624
    %994 = vmatprep.subr.bf16.mxu0 %v618
    %995 = vmatpush2.bf16.msra.mxu0 %v617
    %996 = vmatprep.subr.bf16.mxu0 %v611
    %997 = vmatpush2.bf16.msra.mxu0 %v610
    %998 = vmatprep.subr.bf16.mxu0 %v604
    %999 = vmatpush2.bf16.msra.mxu0 %v603
    %1000 = vmatprep.mubr.bf16.mxu0 %v705
    %1001 = vmatmul.mubr.bf16.gmra.mxu0 %v685
    %v1002 = vpop.f32.mrf.mxu0
    %v1003 = vadd.f32 %v920, %v1002
    %v1004 = vpop.f32.mrf.mxu0
    %v1005 = vadd.f32 %v922, %v1004
    %v1006 = vpop.f32.mrf.mxu0
    %v1007 = vadd.f32 %v924, %v1006
    %v1008 = vpop.f32.mrf.mxu0
    %v1009 = vadd.f32 %v926, %v1008
    %1010 = vmatprep.mubr.bf16.mxu0 %v708
    %1011 = vmatmul.mubr.bf16.gmra.mxu0 %v689
    %v1012 = vpop.f32.mrf.mxu0
    %v1013 = vadd.f32 %v930, %v1012
    %v1014 = vpop.f32.mrf.mxu0
    %v1015 = vadd.f32 %v932, %v1014
    %v1016 = vpop.f32.mrf.mxu0
    %v1017 = vadd.f32 %v934, %v1016
    %v1018 = vpop.f32.mrf.mxu0
    %v1019 = vadd.f32 %v936, %v1018
    %1020 = vmatprep.mubr.bf16.mxu0 %v711
    %1021 = vmatmul.mubr.bf16.gmra.mxu0 %v693
    %v1022 = vpop.f32.mrf.mxu0
    %v1023 = vadd.f32 %v940, %v1022
    %v1024 = vpop.f32.mrf.mxu0
    %v1025 = vadd.f32 %v942, %v1024
    %v1026 = vpop.f32.mrf.mxu0
    %v1027 = vadd.f32 %v944, %v1026
    %v1028 = vpop.f32.mrf.mxu0
    %v1029 = vadd.f32 %v946, %v1028
    %1030 = vmatprep.mubr.bf16.mxu0 %v714
    %1031 = vmatmul.mubr.bf16.gmra.mxu0 %v697
    %v1032 = vpop.f32.mrf.mxu0
    %v1033 = vadd.f32 %v950, %v1032
    %v1034 = vpop.f32.mrf.mxu0
    %v1035 = vadd.f32 %v952, %v1034
    %v1036 = vpop.f32.mrf.mxu0
    %v1037 = vadd.f32 %v954, %v1036
    %v1038 = vpop.f32.mrf.mxu0
    %v1039 = vadd.f32 %v956, %v1038
    %1040 = vmatprep.mubr.bf16.mxu0 %v717
    %1041 = vmatmul.mubr.bf16.gmra.mxu0 %v701
    %v1042 = vpop.f32.mrf.mxu0
    %v1043 = vadd.f32 %v960, %v1042
    %v1044 = vpop.f32.mrf.mxu0
    %v1045 = vadd.f32 %v962, %v1044
    %v1046 = vpop.f32.mrf.mxu0
    %v1047 = vadd.f32 %v964, %v1046
    %v1048 = vpop.f32.mrf.mxu0
    %v1049 = vadd.f32 %v966, %v1048
    %1050 = vdwg.mxu0
    %1051 = vmatprep.subr.bf16.mxu0 %v487
    %1052 = vmatpush1.bf16.msra.mxu0 %v486
    %1053 = vmatprep.subr.bf16.mxu0 %v480
    %1054 = vmatpush1.bf16.msra.mxu0 %v479
    %1055 = vmatprep.subr.bf16.mxu0 %v473
    %1056 = vmatpush1.bf16.msra.mxu0 %v472
    %1057 = vmatprep.subr.bf16.mxu0 %v466
    %1058 = vmatpush1.bf16.msra.mxu0 %v465
    %1059 = vmatprep.subr.bf16.mxu0 %v459
    %1060 = vmatpush1.bf16.msra.mxu0 %v458
    %1061 = vmatprep.subr.bf16.mxu0 %v452
    %1062 = vmatpush1.bf16.msra.mxu0 %v451
    %1063 = vmatprep.subr.bf16.mxu0 %v445
    %1064 = vmatpush1.bf16.msra.mxu0 %v444
    %1065 = vmatprep.subr.bf16.mxu0 %v438
    %1066 = vmatpush1.bf16.msra.mxu0 %v437
    %1067 = vmatprep.subr.bf16.mxu0 %v543
    %1068 = vmatpush2.bf16.msra.mxu0 %v542
    %1069 = vmatprep.subr.bf16.mxu0 %v536
    %1070 = vmatpush2.bf16.msra.mxu0 %v535
    %1071 = vmatprep.subr.bf16.mxu0 %v529
    %1072 = vmatpush2.bf16.msra.mxu0 %v528
    %1073 = vmatprep.subr.bf16.mxu0 %v522
    %1074 = vmatpush2.bf16.msra.mxu0 %v521
    %1075 = vmatprep.subr.bf16.mxu0 %v515
    %1076 = vmatpush2.bf16.msra.mxu0 %v514
    %1077 = vmatprep.subr.bf16.mxu0 %v508
    %1078 = vmatpush2.bf16.msra.mxu0 %v507
    %1079 = vmatprep.subr.bf16.mxu0 %v501
    %1080 = vmatpush2.bf16.msra.mxu0 %v500
    %1081 = vmatprep.subr.bf16.mxu0 %v494
    %1082 = vmatpush2.bf16.msra.mxu0 %v493
    %1083 = vmatprep.mubr.bf16.mxu0 %v684
    %1084 = vmatmul.mubr.bf16.gmra.mxu0 %v683
    %v1085 = vpop.f32.mrf.mxu0
    %v1086 = vadd.f32 0.0, %v1085
    %v1087 = vpop.f32.mrf.mxu0
    %v1088 = vadd.f32 0.0, %v1087
    %v1089 = vpop.f32.mrf.mxu0
    %v1090 = vadd.f32 0.0, %v1089
    %v1091 = vpop.f32.mrf.mxu0
    %v1092 = vadd.f32 0.0, %v1091
    %1093 = vmatprep.mubr.bf16.mxu0 %v688
    %1094 = vmatmul.mubr.bf16.gmra.mxu0 %v687
    %v1095 = vpop.f32.mrf.mxu0
    %v1096 = vadd.f32 0.0, %v1095
    %v1097 = vpop.f32.mrf.mxu0
    %v1098 = vadd.f32 0.0, %v1097
    %v1099 = vpop.f32.mrf.mxu0
    %v1100 = vadd.f32 0.0, %v1099
    %v1101 = vpop.f32.mrf.mxu0
    %v1102 = vadd.f32 0.0, %v1101
    %1103 = vmatprep.mubr.bf16.mxu0 %v692
    %1104 = vmatmul.mubr.bf16.gmra.mxu0 %v691
    %v1105 = vpop.f32.mrf.mxu0
    %v1106 = vadd.f32 0.0, %v1105
    %v1107 = vpop.f32.mrf.mxu0
    %v1108 = vadd.f32 0.0, %v1107
    %v1109 = vpop.f32.mrf.mxu0
    %v1110 = vadd.f32 0.0, %v1109
    %v1111 = vpop.f32.mrf.mxu0
    %v1112 = vadd.f32 0.0, %v1111
    %1113 = vmatprep.mubr.bf16.mxu0 %v696
    %1114 = vmatmul.mubr.bf16.gmra.mxu0 %v695
    %v1115 = vpop.f32.mrf.mxu0
    %v1116 = vadd.f32 0.0, %v1115
    %v1117 = vpop.f32.mrf.mxu0
    %v1118 = vadd.f32 0.0, %v1117
    %v1119 = vpop.f32.mrf.mxu0
    %v1120 = vadd.f32 0.0, %v1119
    %v1121 = vpop.f32.mrf.mxu0
    %v1122 = vadd.f32 0.0, %v1121
    %1123 = vmatprep.mubr.bf16.mxu0 %v700
    %1124 = vmatmul.mubr.bf16.gmra.mxu0 %v699
    %v1125 = vpop.f32.mrf.mxu0
    %v1126 = vadd.f32 0.0, %v1125
    %v1127 = vpop.f32.mrf.mxu0
    %v1128 = vadd.f32 0.0, %v1127
    %v1129 = vpop.f32.mrf.mxu0
    %v1130 = vadd.f32 0.0, %v1129
    %v1131 = vpop.f32.mrf.mxu0
    %v1132 = vadd.f32 0.0, %v1131
    %1133 = vdwg.mxu0
    %1134 = vmatprep.subr.bf16.mxu0 %v599
    %1135 = vmatpush1.bf16.msra.mxu0 %v598
    %1136 = vmatprep.subr.bf16.mxu0 %v592
    %1137 = vmatpush1.bf16.msra.mxu0 %v591
    %1138 = vmatprep.subr.bf16.mxu0 %v585
    %1139 = vmatpush1.bf16.msra.mxu0 %v584
    %1140 = vmatprep.subr.bf16.mxu0 %v578
    %1141 = vmatpush1.bf16.msra.mxu0 %v577
    %1142 = vmatprep.subr.bf16.mxu0 %v571
    %1143 = vmatpush1.bf16.msra.mxu0 %v570
    %1144 = vmatprep.subr.bf16.mxu0 %v564
    %1145 = vmatpush1.bf16.msra.mxu0 %v563
    %1146 = vmatprep.subr.bf16.mxu0 %v557
    %1147 = vmatpush1.bf16.msra.mxu0 %v556
    %1148 = vmatprep.subr.bf16.mxu0 %v550
    %1149 = vmatpush1.bf16.msra.mxu0 %v549
    %1150 = vmatprep.subr.bf16.mxu0 0
    %1151 = vmatpush2.bf16.msra.mxu0 0
    %1152 = vmatprep.subr.bf16.mxu0 0
    %1153 = vmatpush2.bf16.msra.mxu0 0
    %1154 = vmatprep.subr.bf16.mxu0 %v641
    %1155 = vmatpush2.bf16.msra.mxu0 %v640
    %1156 = vmatprep.subr.bf16.mxu0 %v634
    %1157 = vmatpush2.bf16.msra.mxu0 %v633
    %1158 = vmatprep.subr.bf16.mxu0 %v627
    %1159 = vmatpush2.bf16.msra.mxu0 %v626
    %1160 = vmatprep.subr.bf16.mxu0 %v620
    %1161 = vmatpush2.bf16.msra.mxu0 %v619
    %1162 = vmatprep.subr.bf16.mxu0 %v613
    %1163 = vmatpush2.bf16.msra.mxu0 %v612
    %1164 = vmatprep.subr.bf16.mxu0 %v606
    %1165 = vmatpush2.bf16.msra.mxu0 %v605
    %1166 = vmatprep.mubr.bf16.mxu0 %v705
    %1167 = vmatmul.mubr.bf16.gmra.mxu0 %v685
    %v1168 = vpop.f32.mrf.mxu0
    %v1169 = vadd.f32 %v1086, %v1168
    %v1170 = vpop.f32.mrf.mxu0
    %v1171 = vadd.f32 %v1088, %v1170
    %v1172 = vpop.f32.mrf.mxu0
    %v1173 = vadd.f32 %v1090, %v1172
    %v1174 = vpop.f32.mrf.mxu0
    %v1175 = vadd.f32 %v1092, %v1174
    %1176 = vmatprep.mubr.bf16.mxu0 %v708
    %1177 = vmatmul.mubr.bf16.gmra.mxu0 %v689
    %v1178 = vpop.f32.mrf.mxu0
    %v1179 = vadd.f32 %v1096, %v1178
    %v1180 = vpop.f32.mrf.mxu0
    %v1181 = vadd.f32 %v1098, %v1180
    %v1182 = vpop.f32.mrf.mxu0
    %v1183 = vadd.f32 %v1100, %v1182
    %v1184 = vpop.f32.mrf.mxu0
    %v1185 = vadd.f32 %v1102, %v1184
    %1186 = vmatprep.mubr.bf16.mxu0 %v711
    %1187 = vmatmul.mubr.bf16.gmra.mxu0 %v693
    %v1188 = vpop.f32.mrf.mxu0
    %v1189 = vadd.f32 %v1106, %v1188
    %v1190 = vpop.f32.mrf.mxu0
    %v1191 = vadd.f32 %v1108, %v1190
    %v1192 = vpop.f32.mrf.mxu0
    %v1193 = vadd.f32 %v1110, %v1192
    %v1194 = vpop.f32.mrf.mxu0
    %v1195 = vadd.f32 %v1112, %v1194
    %1196 = vmatprep.mubr.bf16.mxu0 %v714
    %1197 = vmatmul.mubr.bf16.gmra.mxu0 %v697
    %v1198 = vpop.f32.mrf.mxu0
    %v1199 = vadd.f32 %v1116, %v1198
    %v1200 = vpop.f32.mrf.mxu0
    %v1201 = vadd.f32 %v1118, %v1200
    %v1202 = vpop.f32.mrf.mxu0
    %v1203 = vadd.f32 %v1120, %v1202
    %v1204 = vpop.f32.mrf.mxu0
    %v1205 = vadd.f32 %v1122, %v1204
    %1206 = vmatprep.mubr.bf16.mxu0 %v717
    %1207 = vmatmul.mubr.bf16.gmra.mxu0 %v701
    %v1208 = vpop.f32.mrf.mxu0
    %v1209 = vadd.f32 %v1126, %v1208
    %v1210 = vpop.f32.mrf.mxu0
    %v1211 = vadd.f32 %v1128, %v1210
    %v1212 = vpop.f32.mrf.mxu0
    %v1213 = vadd.f32 %v1130, %v1212
    %v1214 = vpop.f32.mrf.mxu0
    %v1215 = vadd.f32 %v1132, %v1214
    %1216 = vdwg.mxu0
    %1217 = vmatprep.subr.bf16.mxu0 0
    %1218 = vmatpush1.bf16.msra.mxu0 %v488
    %1219 = vmatprep.subr.bf16.mxu0 0
    %1220 = vmatpush1.bf16.msra.mxu0 %v481
    %1221 = vmatprep.subr.bf16.mxu0 0
    %1222 = vmatpush1.bf16.msra.mxu0 %v474
    %1223 = vmatprep.subr.bf16.mxu0 0
    %1224 = vmatpush1.bf16.msra.mxu0 %v467
    %1225 = vmatprep.subr.bf16.mxu0 0
    %1226 = vmatpush1.bf16.msra.mxu0 %v460
    %1227 = vmatprep.subr.bf16.mxu0 0
    %1228 = vmatpush1.bf16.msra.mxu0 %v453
    %1229 = vmatprep.subr.bf16.mxu0 0
    %1230 = vmatpush1.bf16.msra.mxu0 %v446
    %1231 = vmatprep.subr.bf16.mxu0 0
    %1232 = vmatpush1.bf16.msra.mxu0 %v439
    %1233 = vmatprep.subr.bf16.mxu0 0
    %1234 = vmatpush2.bf16.msra.mxu0 %v544
    %1235 = vmatprep.subr.bf16.mxu0 0
    %1236 = vmatpush2.bf16.msra.mxu0 %v537
    %1237 = vmatprep.subr.bf16.mxu0 0
    %1238 = vmatpush2.bf16.msra.mxu0 %v530
    %1239 = vmatprep.subr.bf16.mxu0 0
    %1240 = vmatpush2.bf16.msra.mxu0 %v523
    %1241 = vmatprep.subr.bf16.mxu0 0
    %1242 = vmatpush2.bf16.msra.mxu0 %v516
    %1243 = vmatprep.subr.bf16.mxu0 0
    %1244 = vmatpush2.bf16.msra.mxu0 %v509
    %1245 = vmatprep.subr.bf16.mxu0 0
    %1246 = vmatpush2.bf16.msra.mxu0 %v502
    %1247 = vmatprep.subr.bf16.mxu0 0
    %1248 = vmatpush2.bf16.msra.mxu0 %v495
    %1249 = vmatprep.mubr.bf16.mxu0 %v684
    %1250 = vmatmul.mubr.bf16.gmra.mxu0 %v683
    %v1251 = vpop.f32.mrf.mxu0
    %v1252 = vadd.f32 0.0, %v1251
    %v1253 = vpop.f32.mrf.mxu0
    %v1254 = vpop.f32.mrf.mxu0
    %v1255 = vadd.f32 0.0, %v1254
    %v1256 = vpop.f32.mrf.mxu0
    %1257 = vmatprep.mubr.bf16.mxu0 %v688
    %1258 = vmatmul.mubr.bf16.gmra.mxu0 %v687
    %v1259 = vpop.f32.mrf.mxu0
    %v1260 = vadd.f32 0.0, %v1259
    %v1261 = vpop.f32.mrf.mxu0
    %v1262 = vpop.f32.mrf.mxu0
    %v1263 = vadd.f32 0.0, %v1262
    %v1264 = vpop.f32.mrf.mxu0
    %1265 = vmatprep.mubr.bf16.mxu0 %v692
    %1266 = vmatmul.mubr.bf16.gmra.mxu0 %v691
    %v1267 = vpop.f32.mrf.mxu0
    %v1268 = vadd.f32 0.0, %v1267
    %v1269 = vpop.f32.mrf.mxu0
    %v1270 = vpop.f32.mrf.mxu0
    %v1271 = vadd.f32 0.0, %v1270
    %v1272 = vpop.f32.mrf.mxu0
    %1273 = vmatprep.mubr.bf16.mxu0 %v696
    %1274 = vmatmul.mubr.bf16.gmra.mxu0 %v695
    %v1275 = vpop.f32.mrf.mxu0
    %v1276 = vadd.f32 0.0, %v1275
    %v1277 = vpop.f32.mrf.mxu0
    %v1278 = vpop.f32.mrf.mxu0
    %v1279 = vadd.f32 0.0, %v1278
    %v1280 = vpop.f32.mrf.mxu0
    %1281 = vmatprep.mubr.bf16.mxu0 %v700
    %1282 = vmatmul.mubr.bf16.gmra.mxu0 %v699
    %v1283 = vpop.f32.mrf.mxu0
    %v1284 = vadd.f32 0.0, %v1283
    %v1285 = vpop.f32.mrf.mxu0
    %v1286 = vpop.f32.mrf.mxu0
    %v1287 = vadd.f32 0.0, %v1286
    %v1288 = vpop.f32.mrf.mxu0
    %1289 = vdwg.mxu0
    %1290 = vmatprep.subr.bf16.mxu0 0
    %1291 = vmatpush1.bf16.msra.mxu0 %v600
    %1292 = vmatprep.subr.bf16.mxu0 0
    %1293 = vmatpush1.bf16.msra.mxu0 %v593
    %1294 = vmatprep.subr.bf16.mxu0 0
    %1295 = vmatpush1.bf16.msra.mxu0 %v586
    %1296 = vmatprep.subr.bf16.mxu0 0
    %1297 = vmatpush1.bf16.msra.mxu0 %v579
    %1298 = vmatprep.subr.bf16.mxu0 0
    %1299 = vmatpush1.bf16.msra.mxu0 %v572
    %1300 = vmatprep.subr.bf16.mxu0 0
    %1301 = vmatpush1.bf16.msra.mxu0 %v565
    %1302 = vmatprep.subr.bf16.mxu0 0
    %1303 = vmatpush1.bf16.msra.mxu0 %v558
    %1304 = vmatprep.subr.bf16.mxu0 0
    %1305 = vmatpush1.bf16.msra.mxu0 %v551
    %1306 = vmatprep.subr.bf16.mxu0 0
    %1307 = vmatpush2.bf16.msra.mxu0 0
    %1308 = vmatprep.subr.bf16.mxu0 0
    %1309 = vmatpush2.bf16.msra.mxu0 0
    %1310 = vmatprep.subr.bf16.mxu0 0
    %1311 = vmatpush2.bf16.msra.mxu0 %v642
    %1312 = vmatprep.subr.bf16.mxu0 0
    %1313 = vmatpush2.bf16.msra.mxu0 %v635
    %1314 = vmatprep.subr.bf16.mxu0 0
    %1315 = vmatpush2.bf16.msra.mxu0 %v628
    %1316 = vmatprep.subr.bf16.mxu0 0
    %1317 = vmatpush2.bf16.msra.mxu0 %v621
    %1318 = vmatprep.subr.bf16.mxu0 0
    %1319 = vmatpush2.bf16.msra.mxu0 %v614
    %1320 = vmatprep.subr.bf16.mxu0 0
    %1321 = vmatpush2.bf16.msra.mxu0 %v607
    %1322 = vmatprep.mubr.bf16.mxu0 %v705
    %1323 = vmatmul.mubr.bf16.gmra.mxu0 %v685
    %v1324 = vpop.f32.mrf.mxu0
    %v1325 = vadd.f32 %v1252, %v1324
    %v1326 = vpop.f32.mrf.mxu0
    %v1327 = vpop.f32.mrf.mxu0
    %v1328 = vadd.f32 %v1255, %v1327
    %v1329 = vpop.f32.mrf.mxu0
    %1330 = vmatprep.mubr.bf16.mxu0 %v708
    %1331 = vmatmul.mubr.bf16.gmra.mxu0 %v689
    %v1332 = vpop.f32.mrf.mxu0
    %v1333 = vadd.f32 %v1260, %v1332
    %v1334 = vpop.f32.mrf.mxu0
    %v1335 = vpop.f32.mrf.mxu0
    %v1336 = vadd.f32 %v1263, %v1335
    %v1337 = vpop.f32.mrf.mxu0
    %1338 = vmatprep.mubr.bf16.mxu0 %v711
    %1339 = vmatmul.mubr.bf16.gmra.mxu0 %v693
    %v1340 = vpop.f32.mrf.mxu0
    %v1341 = vadd.f32 %v1268, %v1340
    %v1342 = vpop.f32.mrf.mxu0
    %v1343 = vpop.f32.mrf.mxu0
    %v1344 = vadd.f32 %v1271, %v1343
    %v1345 = vpop.f32.mrf.mxu0
    %1346 = vmatprep.mubr.bf16.mxu0 %v714
    %1347 = vmatmul.mubr.bf16.gmra.mxu0 %v697
    %v1348 = vpop.f32.mrf.mxu0
    %v1349 = vadd.f32 %v1276, %v1348
    %v1350 = vpop.f32.mrf.mxu0
    %v1351 = vpop.f32.mrf.mxu0
    %v1352 = vadd.f32 %v1279, %v1351
    %v1353 = vpop.f32.mrf.mxu0
    %1354 = vmatprep.mubr.bf16.mxu0 %v717
    %1355 = vmatmul.mubr.bf16.gmra.mxu0 %v701
    %v1356 = vpop.f32.mrf.mxu0
    %v1357 = vadd.f32 %v1284, %v1356
    %v1358 = vpop.f32.mrf.mxu0
    %v1359 = vpop.f32.mrf.mxu0
    %v1360 = vadd.f32 %v1287, %v1359
    %v1361 = vpop.f32.mrf.mxu0
    %1362 = vdwg.mxu0
    %1363 = vst [vmem:[#allocation2] sm:$0xff] %v837
    %1364 = vst [vmem:[#allocation2 + $0x8] sm:$0xff] %v839
    %1365 = vst [vmem:[#allocation2 + $0x10] sm:$0xff] %v1003
    %1366 = vst [vmem:[#allocation2 + $0x18] sm:$0xff] %v1005
    %1367 = vst [vmem:[#allocation2 + $0x20] sm:$0xff] %v1169
    %1368 = vst [vmem:[#allocation2 + $0x28] sm:$0xff] %v1171
    %vm1369 = vcmask 130048
    %1370 = vst.msk [vmem:[#allocation2 + $0x30] sm:$0xff] %vm1369, %v1325
    %1371 = vst [vmem:[#allocation2 + $0x38] sm:$0xff] %v841
    %1372 = vst [vmem:[#allocation2 + $0x40] sm:$0xff] %v843
    %1373 = vst [vmem:[#allocation2 + $0x48] sm:$0xff] %v1007
    %1374 = vst [vmem:[#allocation2 + $0x50] sm:$0xff] %v1009
    %1375 = vst [vmem:[#allocation2 + $0x58] sm:$0xff] %v1173
    %1376 = vst [vmem:[#allocation2 + $0x60] sm:$0xff] %v1175
    %1377 = vst.msk [vmem:[#allocation2 + $0x68] sm:$0xff] %vm1369, %v1328
    %1378 = vst [vmem:[#allocation2 + $0x70] sm:$0xff] %v847
    %1379 = vst [vmem:[#allocation2 + $0x78] sm:$0xff] %v849
    %1380 = vst [vmem:[#allocation2 + $0x80] sm:$0xff] %v1013
    %1381 = vst [vmem:[#allocation2 + $0x88] sm:$0xff] %v1015
    %1382 = vst [vmem:[#allocation2 + $0x90] sm:$0xff] %v1179
    %1383 = vst [vmem:[#allocation2 + $0x98] sm:$0xff] %v1181
    %1384 = vst.msk [vmem:[#allocation2 + $0xa0] sm:$0xff] %vm1369, %v1333
    %1385 = vst [vmem:[#allocation2 + $0xa8] sm:$0xff] %v851
    %1386 = vst [vmem:[#allocation2 + $0xb0] sm:$0xff] %v853
    %1387 = vst [vmem:[#allocation2 + $0xb8] sm:$0xff] %v1017
    %1388 = vst [vmem:[#allocation2 + $0xc0] sm:$0xff] %v1019
    %1389 = vst [vmem:[#allocation2 + $0xc8] sm:$0xff] %v1183
    %1390 = vst [vmem:[#allocation2 + $0xd0] sm:$0xff] %v1185
    %1391 = vst.msk [vmem:[#allocation2 + $0xd8] sm:$0xff] %vm1369, %v1336
    %1392 = vst [vmem:[#allocation2 + $0xe0] sm:$0xff] %v857
    %1393 = vst [vmem:[#allocation2 + $0xe8] sm:$0xff] %v859
    %1394 = vst [vmem:[#allocation2 + $0xf0] sm:$0xff] %v1023
    %1395 = vst [vmem:[#allocation2 + $0xf8] sm:$0xff] %v1025
    %1396 = vst [vmem:[#allocation2 + $0x100] sm:$0xff] %v1189
    %1397 = vst [vmem:[#allocation2 + $0x108] sm:$0xff] %v1191
    %1398 = vst.msk [vmem:[#allocation2 + $0x110] sm:$0xff] %vm1369, %v1341
    %1399 = vst [vmem:[#allocation2 + $0x118] sm:$0xff] %v861
    %1400 = vst [vmem:[#allocation2 + $0x120] sm:$0xff] %v863
    %1401 = vst [vmem:[#allocation2 + $0x128] sm:$0xff] %v1027
    %1402 = vst [vmem:[#allocation2 + $0x130] sm:$0xff] %v1029
    %1403 = vst [vmem:[#allocation2 + $0x138] sm:$0xff] %v1193
    %1404 = vst [vmem:[#allocation2 + $0x140] sm:$0xff] %v1195
    %1405 = vst.msk [vmem:[#allocation2 + $0x148] sm:$0xff] %vm1369, %v1344
    %1406 = vst [vmem:[#allocation2 + $0x150] sm:$0xff] %v867
    %1407 = vst [vmem:[#allocation2 + $0x158] sm:$0xff] %v869
    %1408 = vst [vmem:[#allocation2 + $0x160] sm:$0xff] %v1033
    %1409 = vst [vmem:[#allocation2 + $0x168] sm:$0xff] %v1035
    %1410 = vst [vmem:[#allocation2 + $0x170] sm:$0xff] %v1199
    %1411 = vst [vmem:[#allocation2 + $0x178] sm:$0xff] %v1201
    %1412 = vst.msk [vmem:[#allocation2 + $0x180] sm:$0xff] %vm1369, %v1349
    %1413 = vst [vmem:[#allocation2 + $0x188] sm:$0xff] %v871
    %1414 = vst [vmem:[#allocation2 + $0x190] sm:$0xff] %v873
    %1415 = vst [vmem:[#allocation2 + $0x198] sm:$0xff] %v1037
    %1416 = vst [vmem:[#allocation2 + $0x1a0] sm:$0xff] %v1039
    %1417 = vst [vmem:[#allocation2 + $0x1a8] sm:$0xff] %v1203
    %1418 = vst [vmem:[#allocation2 + $0x1b0] sm:$0xff] %v1205
    %1419 = vst.msk [vmem:[#allocation2 + $0x1b8] sm:$0xff] %vm1369, %v1352
    %1420 = vst [vmem:[#allocation2 + $0x1c0] sm:$0xff] %v877
    %1421 = vst [vmem:[#allocation2 + $0x1c8] sm:$0xff] %v879
    %1422 = vst [vmem:[#allocation2 + $0x1d0] sm:$0xff] %v1043
    %1423 = vst [vmem:[#allocation2 + $0x1d8] sm:$0xff] %v1045
    %1424 = vst [vmem:[#allocation2 + $0x1e0] sm:$0xff] %v1209
    %1425 = vst [vmem:[#allocation2 + $0x1e8] sm:$0xff] %v1211
    %1426 = vst.msk [vmem:[#allocation2 + $0x1f0] sm:$0xff] %vm1369, %v1357
    %1427 = vst [vmem:[#allocation2 + $0x1f8] sm:$0xff] %v881
    %1428 = vst [vmem:[#allocation2 + $0x200] sm:$0xff] %v883
    %1429 = vst [vmem:[#allocation2 + $0x208] sm:$0xff] %v1047
    %1430 = vst [vmem:[#allocation2 + $0x210] sm:$0xff] %v1049
    %1431 = vst [vmem:[#allocation2 + $0x218] sm:$0xff] %v1213
    %1432 = vst [vmem:[#allocation2 + $0x220] sm:$0xff] %v1215
    %1433 = vst.msk [vmem:[#allocation2 + $0x228] sm:$0xff] %vm1369, %v1360
    // Predicated region
    $region10: #{tpu_custom_call.1} parent=1 // pred_check
      _
    $region11: #{tpu_custom_call.1} parent=1 // pred_check_branch
      %1435 = sbr.rel (0) target = $region13
    $region12: #{tpu_custom_call.1} parent=1 // pred_region
      %s1437 = ssub.s32 8960, 8960
      %1438 = vsyncadd [#allocation3], %s1437
      %s1439 = sshll.u32 [#allocation2], 4
      %s1440 = int_to_ptr.vmem [resolvable:$true] %s1439
      %1445 = dma.vmem_to_hbm [thread:$0]  %s1440, 8960, %s2, [#allocation3], 896, 896, 56
    $region13: #{tpu_custom_call.1} parent=1 // pred_fallthru
      _
    // Predicated region
    $region14: #{tpu_custom_call.1} parent=1 // pred_check
      _
    $region15: #{tpu_custom_call.1} parent=1 // pred_check_branch
      %1447 = sbr.rel (0) target = $region17
    $region16: #{tpu_custom_call.1} parent=1 // pred_region
      %1448 = dma.done [#allocation3], 8960
    $region17: #{tpu_custom_call.1} parent=1 // pred_fallthru
      _
    %1449 = vsyncpa [#allocation3], 1

</llo_original>
